<compile_context>
chip_gen: v7x
topology: tpu7x:2x2x1
jax: 0.10.0
libtpu: 0.0.40
codegen_flags: <defaults>
</compile_context>

<pallas_src>
import math

import jax
import jax.numpy as jnp
from jax.experimental import pallas as pl
from jax.experimental.pallas import tpu as pltpu


# ---------------------------------------------------------------------------
# Fused kernel: for out-feature tile j
#   y_tile (B, TO) = x @ W0^T_tile + sum_k c_k * (x @ PW_k^T_tile)
#   b_tile (1, TO) = b0_tile       + sum_k c_k * PB[k, tile]
# All matmuls are bf16 x bf16 -> f32 on the MXU; combine in f32 on the VPU.
# ---------------------------------------------------------------------------
def _intr_linear_kernel(cur_ref, x_ref, wslab_ref, pb_ref, ib_ref, o_ref):
    d = pb_ref.shape[0]

    x = x_ref[...]                                   # (B, in) bf16

    # Hoist the d SMEM scalar reads ahead of all vector/MXU work.
    c = [cur_ref[0, k] for k in range(d)]

    # Rank-(d+1) contraction folded into the MXU.  d is small & static -> unrolled.
    acc = jnp.dot(x, wslab_ref[0], preferred_element_type=jnp.float32)   # W0^T term
    bias = ib_ref[...]                                                    # (1, TO) f32
    for k in range(d):
        acc = acc + c[k] * jnp.dot(x, wslab_ref[k + 1],
                                   preferred_element_type=jnp.float32)
        bias = bias + c[k] * pb_ref[pl.ds(k, 1), :]

    o_ref[...] = (acc + bias).astype(o_ref.dtype)


# ---------------------------------------------------------------------------
# Generation-aware VMEM budgeting + lane-dense tile picking.
# ---------------------------------------------------------------------------
def _vmem_budget_bytes() -> int:
    cap = 64 * 1024 * 1024  # conservative default: v7x per-TC physical VMEM
    try:
        cap = int(pltpu.get_tpu_info().vmem_capacity_bytes)
    except Exception:
        pass
    # Headroom for compiler-internal scratch / in-kernel temps:
    #   v7x (64 MiB)      -> ~40 MiB usable
    #   v5e/v6e (128 MiB) -> ~96 MiB usable
    return max(cap - (32 << 20), (cap * 5) // 8)


def _vmem_estimate_bytes(B, in_f, d, TO, w_bytes, out_bytes) -> int:
    slab = 2 * (d + 1) * in_f * TO * w_bytes      # double-buffered streamed slab
    xb = 2 * B * in_f * w_bytes                   # x block
    pb = 2 * d * TO * 4                           # project_bias block
    ib = 2 * TO * 4                               # initial_bias block
    ob = 2 * B * TO * out_bytes                   # output block
    tmp = B * TO * 4 + B * in_f * 4               # f32 acc + misc temps
    return slab + xb + pb + ib + ob + tmp + (1 << 20)


def _pick_out_tile(out_f, B, in_f, d, w_bytes, out_bytes, vmem_budget) -> int:
    fitting = [t for t in (1024, 512, 256, 128)
               if out_f % t == 0
               and _vmem_estimate_bytes(B, in_f, d, t, w_bytes, out_bytes) <= vmem_budget]
    # Strongly prefer >= 4 grid steps (pipelining) and an even count (v7x megacore).
    for t in fitting:
        steps = out_f // t
        if steps >= 4 and steps % 2 == 0:
            return t
    # Relax: at least 2 steps gives some overlap / sharding.
    for t in fitting:
        if out_f // t >= 2:
            return t
    if fitting:
        return fitting[0]
    # Non-lane-dense fallback (correct but slow: masked vst) -- pad out_f upstream.
    for t in (512, 256, 128):
        if out_f % t == 0:
            return t
    return out_f


# ---------------------------------------------------------------------------
# One-time parameter layout plumbing.  Call ONCE at parameter-init time (outside
# the jitted train step); pass the returned slabs into intr_linear_forward.
# ---------------------------------------------------------------------------
def prepare_intr_linear_params(project_weight, initial_weight, project_bias,
                               initial_bias, *, weight_dtype=jnp.bfloat16):
    out_f, in_f = initial_weight.shape
    d = project_weight.shape[0]
    # project_weight (d, out*in) -> (d, in, out); prepend W0^T -> slab (d+1, in, out).
    pw_t = jnp.transpose(project_weight.reshape(d, out_f, in_f), (0, 2, 1))
    w_slab = jnp.concatenate([initial_weight.T[None], pw_t],
                             axis=0).astype(weight_dtype)            # (d+1, in, out)
    pb = project_bias.astype(jnp.float32)                            # (d, out)
    ib = initial_bias.reshape(1, out_f).astype(jnp.float32)          # (1, out)
    return w_slab, pb, ib


def intr_linear_forward(x, current, w_slab, pb, ib, *, out_dtype=jnp.float32):
    d_plus_1, in_f, out_f = w_slab.shape
    d = d_plus_1 - 1
    B = x.shape[0]

    w_bytes = jnp.dtype(w_slab.dtype).itemsize
    out_bytes = jnp.dtype(out_dtype).itemsize

    cur = current.astype(jnp.float32)        # (1, d) -> SMEM
    xb = x.astype(w_slab.dtype)              # (B, in)

    budget = _vmem_budget_bytes()
    TO = _pick_out_tile(out_f, B, in_f, d, w_bytes, out_bytes, budget)
    grid = (out_f // TO,)

    est = _vmem_estimate_bytes(B, in_f, d, TO, w_bytes, out_bytes)
    vmem_limit = max(min(budget, est + (8 << 20)), est + (2 << 20))

    flops = 2 * B * (d + 1) * in_f * out_f
    bytes_accessed = ((d + 1) * in_f * out_f * w_bytes      # weight slab (dominant)
                      + B * in_f * w_bytes                   # x
                      + (d + 1) * out_f * 4                  # biases
                      + B * out_f * out_bytes)               # output

    return pl.pallas_call(
        _intr_linear_kernel,
        out_shape=jax.ShapeDtypeStruct((B, out_f), out_dtype),
        grid=grid,
        in_specs=[
            pl.BlockSpec(memory_space=pltpu.MemorySpace.SMEM),        # current (1, d)
            pl.BlockSpec((B, in_f), lambda j: (0, 0)),                # x       (B, in)
            pl.BlockSpec((d + 1, in_f, TO), lambda j: (0, 0, j)),     # W^T slab
            pl.BlockSpec((d, TO), lambda j: (0, j)),                  # PB      (d, TO)
            pl.BlockSpec((1, TO), lambda j: (0, j)),                  # b0      (1, TO)
        ],
        out_specs=pl.BlockSpec((B, TO), lambda j: (0, j)),
        compiler_params=pltpu.CompilerParams(
            dimension_semantics=("parallel",),   # shard out-tiles across TCs (v7x)
            vmem_limit_bytes=int(vmem_limit),
        ),
        cost_estimate=pl.CostEstimate(flops=flops, transcendentals=0,
                                      bytes_accessed=bytes_accessed),
    )(cur, xb, w_slab, pb, ib)
    # TODO(synk): for very large in_features add K (in_features) tiling with an f32
    # VMEM accumulator on an innermost "arbitrary" axis, and tile B as a second
    # "parallel" axis for large training batches. Not needed at these sizes -- the
    # kernel is HBM-bandwidth bound on the weight slab.


# ---------------------------------------------------------------------------
# Deterministic parameter initialization (mirrors module __init__, proj_kind='dense').
# ---------------------------------------------------------------------------
def init_dense_projection(key, shape):
    p = jax.random.uniform(key, shape, dtype=jnp.float32)
    row_norm = jnp.linalg.norm(p, axis=1, keepdims=True)
    return p / row_norm


if __name__ == "__main__":
    batch = 16
    in_features = 256
    out_features = 512
    intr_dim = 8

    key = jax.random.PRNGKey(0)
    k_cur, k_pw, k_iw, k_pb, k_ib, k_x = jax.random.split(key, 6)

    # current: (1, intr_dim)  (the trainable intrinsic parameter)
    current = jax.random.normal(k_cur, (1, intr_dim), dtype=jnp.float32)

    # project_weight: (intr_dim, in*out), dense row-normalized
    project_weight = init_dense_projection(k_pw, (intr_dim, in_features * out_features))
    # initial_weight: (out, in), kaiming_uniform(a=sqrt(5)) -> U(-1/sqrt(fan_in), 1/sqrt(fan_in))
    bound = 1.0 / math.sqrt(in_features)
    initial_weight = jax.random.uniform(
        k_iw, (out_features, in_features), minval=-bound, maxval=bound, dtype=jnp.float32)

    # project_bias: (intr_dim, out), dense row-normalized
    project_bias = init_dense_projection(k_pb, (intr_dim, out_features))
    # initial_bias: U(0, 1)
    initial_bias = jax.random.uniform(k_ib, (out_features,), dtype=jnp.float32)

    x = jax.random.normal(k_x, (batch, in_features), dtype=jnp.float32)

    # One-time layout plumbing (lives at parameter-init time during training).
    w_slab, pb, ib = prepare_intr_linear_params(
        project_weight, initial_weight, project_bias, initial_bias)

    y = intr_linear_forward(x, current, w_slab, pb, ib)
    y = jax.block_until_ready(y)

    # Pure-JAX reference following the module semantics, computed from the same
    # bf16-stored weights/activations the kernel consumes (f32 math, HIGHEST).
    # NOTE: bf16 weight/activation storage is an intentional precision downgrade vs.
    # the f32 PyTorch module; results match the module only to ~1e-2.
    pw_q = project_weight.astype(jnp.bfloat16).astype(jnp.float32)
    iw_q = initial_weight.astype(jnp.bfloat16).astype(jnp.float32)
    x_q = x.astype(jnp.bfloat16).astype(jnp.float32)
    w_ref = iw_q + jnp.dot(current, pw_q,
                           precision=jax.lax.Precision.HIGHEST
                           ).reshape(out_features, in_features)
    b_ref = initial_bias + jnp.dot(current, project_bias,
                                   precision=jax.lax.Precision.HIGHEST
                                   ).reshape(out_features)
    y_ref = jnp.dot(x_q, w_ref.T, precision=jax.lax.Precision.HIGHEST) + b_ref

    assert y.shape == (batch, out_features)
    assert jnp.allclose(y, y_ref, atol=2e-2, rtol=2e-2), "mismatch vs reference"

    print("KERNEL_OK")
</pallas_src>

<mosaic_0001>
module attributes {stable_mosaic.version = 11 : i64} {
  func.func @_intr_linear_kernel(%arg0: i32, %arg1: memref<1x8xf32, #tpu.memory_space<smem>>, %arg2: memref<16x256xbf16, #tpu.memory_space<vmem>>, %arg3: memref<9x256x128xbf16, #tpu.memory_space<vmem>>, %arg4: memref<8x128xf32, #tpu.memory_space<vmem>>, %arg5: memref<1x128xf32, #tpu.memory_space<vmem>>, %arg6: memref<16x128xf32, #tpu.memory_space<vmem>>) attributes {dimension_semantics = [#tpu.dimension_semantics<parallel>], iteration_bounds = array<i64: 4>, scalar_prefetch = 0 : i64, scratch_operands = 0 : i64, tpu.core_type = #tpu.core_type<tc>, window_params = [{transform_indices = @transform_0, window_bounds = array<i64: 1, 8>}, {pipeline_mode = #tpu.pipeline_mode<synchronous>, transform_indices = @transform_1, window_bounds = array<i64: 16, 256>}, {transform_indices = @transform_2, window_bounds = array<i64: 9, 256, 128>}, {transform_indices = @transform_3, window_bounds = array<i64: 8, 128>}, {transform_indices = @transform_4, window_bounds = array<i64: 1, 128>}, {transform_indices = @transform_5, window_bounds = array<i64: 16, 128>}]} {
    %c0 = arith.constant 0 : index
    %c0_0 = arith.constant 0 : index
    %0 = vector.load %arg2[%c0, %c0_0] : memref<16x256xbf16, #tpu.memory_space<vmem>>, vector<16x256xbf16>
    %c0_1 = arith.constant 0 : index
    %c0_2 = arith.constant 0 : index
    %1 = memref.load %arg1[%c0_1, %c0_2] : memref<1x8xf32, #tpu.memory_space<smem>>
    %c0_3 = arith.constant 0 : index
    %c1 = arith.constant 1 : index
    %2 = memref.load %arg1[%c0_3, %c1] : memref<1x8xf32, #tpu.memory_space<smem>>
    %c0_4 = arith.constant 0 : index
    %c2 = arith.constant 2 : index
    %3 = memref.load %arg1[%c0_4, %c2] : memref<1x8xf32, #tpu.memory_space<smem>>
    %c0_5 = arith.constant 0 : index
    %c3 = arith.constant 3 : index
    %4 = memref.load %arg1[%c0_5, %c3] : memref<1x8xf32, #tpu.memory_space<smem>>
    %c0_6 = arith.constant 0 : index
    %c4 = arith.constant 4 : index
    %5 = memref.load %arg1[%c0_6, %c4] : memref<1x8xf32, #tpu.memory_space<smem>>
    %c0_7 = arith.constant 0 : index
    %c5 = arith.constant 5 : index
    %6 = memref.load %arg1[%c0_7, %c5] : memref<1x8xf32, #tpu.memory_space<smem>>
    %c0_8 = arith.constant 0 : index
    %c6 = arith.constant 6 : index
    %7 = memref.load %arg1[%c0_8, %c6] : memref<1x8xf32, #tpu.memory_space<smem>>
    %c0_9 = arith.constant 0 : index
    %c7 = arith.constant 7 : index
    %8 = memref.load %arg1[%c0_9, %c7] : memref<1x8xf32, #tpu.memory_space<smem>>
    %c0_10 = arith.constant 0 : index
    %c0_11 = arith.constant 0 : index
    %c0_12 = arith.constant 0 : index
    %9 = vector.load %arg3[%c0_10, %c0_11, %c0_12] : memref<9x256x128xbf16, #tpu.memory_space<vmem>>, vector<1x256x128xbf16>
    %10 = vector.shape_cast %9 : vector<1x256x128xbf16> to vector<256x128xbf16>
    %cst = arith.constant dense<0.000000e+00> : vector<16x128xf32>
    %11 = tpu.matmul %0, %10, %cst {dimension_numbers = #tpu.dot_dimension_numbers<[1], [0], [0], [1], [0, 0, 1, 1], [], []>} : vector<16x256xbf16>, vector<256x128xbf16>, vector<16x128xf32> -> vector<16x128xf32>
    %c0_13 = arith.constant 0 : index
    %c0_14 = arith.constant 0 : index
    %12 = vector.load %arg5[%c0_13, %c0_14] : memref<1x128xf32, #tpu.memory_space<vmem>>, vector<1x128xf32>
    %c1_15 = arith.constant 1 : index
    %c0_16 = arith.constant 0 : index
    %c0_17 = arith.constant 0 : index
    %13 = vector.load %arg3[%c1_15, %c0_16, %c0_17] : memref<9x256x128xbf16, #tpu.memory_space<vmem>>, vector<1x256x128xbf16>
    %14 = vector.shape_cast %13 : vector<1x256x128xbf16> to vector<256x128xbf16>
    %cst_18 = arith.constant dense<0.000000e+00> : vector<16x128xf32>
    %15 = tpu.matmul %0, %14, %cst_18 {dimension_numbers = #tpu.dot_dimension_numbers<[1], [0], [0], [1], [0, 0, 1, 1], [], []>} : vector<16x256xbf16>, vector<256x128xbf16>, vector<16x128xf32> -> vector<16x128xf32>
    %16 = vector.broadcast %1 : f32 to vector<16x128xf32>
    %17 = arith.mulf %16, %15 : vector<16x128xf32>
    %18 = arith.addf %11, %17 : vector<16x128xf32>
    %c0_19 = arith.constant 0 : index
    %c0_20 = arith.constant 0 : index
    %19 = vector.load %arg4[%c0_19, %c0_20] : memref<8x128xf32, #tpu.memory_space<vmem>>, vector<1x128xf32>
    %20 = vector.broadcast %1 : f32 to vector<1x128xf32>
    %21 = arith.mulf %20, %19 : vector<1x128xf32>
    %22 = arith.addf %12, %21 : vector<1x128xf32>
    %c2_21 = arith.constant 2 : index
    %c0_22 = arith.constant 0 : index
    %c0_23 = arith.constant 0 : index
    %23 = vector.load %arg3[%c2_21, %c0_22, %c0_23] : memref<9x256x128xbf16, #tpu.memory_space<vmem>>, vector<1x256x128xbf16>
    %24 = vector.shape_cast %23 : vector<1x256x128xbf16> to vector<256x128xbf16>
    %cst_24 = arith.constant dense<0.000000e+00> : vector<16x128xf32>
    %25 = tpu.matmul %0, %24, %cst_24 {dimension_numbers = #tpu.dot_dimension_numbers<[1], [0], [0], [1], [0, 0, 1, 1], [], []>} : vector<16x256xbf16>, vector<256x128xbf16>, vector<16x128xf32> -> vector<16x128xf32>
    %26 = vector.broadcast %2 : f32 to vector<16x128xf32>
    %27 = arith.mulf %26, %25 : vector<16x128xf32>
    %28 = arith.addf %18, %27 : vector<16x128xf32>
    %c1_25 = arith.constant 1 : index
    %c0_26 = arith.constant 0 : index
    %29 = vector.load %arg4[%c1_25, %c0_26] : memref<8x128xf32, #tpu.memory_space<vmem>>, vector<1x128xf32>
    %30 = vector.broadcast %2 : f32 to vector<1x128xf32>
    %31 = arith.mulf %30, %29 : vector<1x128xf32>
    %32 = arith.addf %22, %31 : vector<1x128xf32>
    %c3_27 = arith.constant 3 : index
    %c0_28 = arith.constant 0 : index
    %c0_29 = arith.constant 0 : index
    %33 = vector.load %arg3[%c3_27, %c0_28, %c0_29] : memref<9x256x128xbf16, #tpu.memory_space<vmem>>, vector<1x256x128xbf16>
    %34 = vector.shape_cast %33 : vector<1x256x128xbf16> to vector<256x128xbf16>
    %cst_30 = arith.constant dense<0.000000e+00> : vector<16x128xf32>
    %35 = tpu.matmul %0, %34, %cst_30 {dimension_numbers = #tpu.dot_dimension_numbers<[1], [0], [0], [1], [0, 0, 1, 1], [], []>} : vector<16x256xbf16>, vector<256x128xbf16>, vector<16x128xf32> -> vector<16x128xf32>
    %36 = vector.broadcast %3 : f32 to vector<16x128xf32>
    %37 = arith.mulf %36, %35 : vector<16x128xf32>
    %38 = arith.addf %28, %37 : vector<16x128xf32>
    %c2_31 = arith.constant 2 : index
    %c0_32 = arith.constant 0 : index
    %39 = vector.load %arg4[%c2_31, %c0_32] : memref<8x128xf32, #tpu.memory_space<vmem>>, vector<1x128xf32>
    %40 = vector.broadcast %3 : f32 to vector<1x128xf32>
    %41 = arith.mulf %40, %39 : vector<1x128xf32>
    %42 = arith.addf %32, %41 : vector<1x128xf32>
    %c4_33 = arith.constant 4 : index
    %c0_34 = arith.constant 0 : index
    %c0_35 = arith.constant 0 : index
    %43 = vector.load %arg3[%c4_33, %c0_34, %c0_35] : memref<9x256x128xbf16, #tpu.memory_space<vmem>>, vector<1x256x128xbf16>
    %44 = vector.shape_cast %43 : vector<1x256x128xbf16> to vector<256x128xbf16>
    %cst_36 = arith.constant dense<0.000000e+00> : vector<16x128xf32>
    %45 = tpu.matmul %0, %44, %cst_36 {dimension_numbers = #tpu.dot_dimension_numbers<[1], [0], [0], [1], [0, 0, 1, 1], [], []>} : vector<16x256xbf16>, vector<256x128xbf16>, vector<16x128xf32> -> vector<16x128xf32>
    %46 = vector.broadcast %4 : f32 to vector<16x128xf32>
    %47 = arith.mulf %46, %45 : vector<16x128xf32>
    %48 = arith.addf %38, %47 : vector<16x128xf32>
    %c3_37 = arith.constant 3 : index
    %c0_38 = arith.constant 0 : index
    %49 = vector.load %arg4[%c3_37, %c0_38] : memref<8x128xf32, #tpu.memory_space<vmem>>, vector<1x128xf32>
    %50 = vector.broadcast %4 : f32 to vector<1x128xf32>
    %51 = arith.mulf %50, %49 : vector<1x128xf32>
    %52 = arith.addf %42, %51 : vector<1x128xf32>
    %c5_39 = arith.constant 5 : index
    %c0_40 = arith.constant 0 : index
    %c0_41 = arith.constant 0 : index
    %53 = vector.load %arg3[%c5_39, %c0_40, %c0_41] : memref<9x256x128xbf16, #tpu.memory_space<vmem>>, vector<1x256x128xbf16>
    %54 = vector.shape_cast %53 : vector<1x256x128xbf16> to vector<256x128xbf16>
    %cst_42 = arith.constant dense<0.000000e+00> : vector<16x128xf32>
    %55 = tpu.matmul %0, %54, %cst_42 {dimension_numbers = #tpu.dot_dimension_numbers<[1], [0], [0], [1], [0, 0, 1, 1], [], []>} : vector<16x256xbf16>, vector<256x128xbf16>, vector<16x128xf32> -> vector<16x128xf32>
    %56 = vector.broadcast %5 : f32 to vector<16x128xf32>
    %57 = arith.mulf %56, %55 : vector<16x128xf32>
    %58 = arith.addf %48, %57 : vector<16x128xf32>
    %c4_43 = arith.constant 4 : index
    %c0_44 = arith.constant 0 : index
    %59 = vector.load %arg4[%c4_43, %c0_44] : memref<8x128xf32, #tpu.memory_space<vmem>>, vector<1x128xf32>
    %60 = vector.broadcast %5 : f32 to vector<1x128xf32>
    %61 = arith.mulf %60, %59 : vector<1x128xf32>
    %62 = arith.addf %52, %61 : vector<1x128xf32>
    %c6_45 = arith.constant 6 : index
    %c0_46 = arith.constant 0 : index
    %c0_47 = arith.constant 0 : index
    %63 = vector.load %arg3[%c6_45, %c0_46, %c0_47] : memref<9x256x128xbf16, #tpu.memory_space<vmem>>, vector<1x256x128xbf16>
    %64 = vector.shape_cast %63 : vector<1x256x128xbf16> to vector<256x128xbf16>
    %cst_48 = arith.constant dense<0.000000e+00> : vector<16x128xf32>
    %65 = tpu.matmul %0, %64, %cst_48 {dimension_numbers = #tpu.dot_dimension_numbers<[1], [0], [0], [1], [0, 0, 1, 1], [], []>} : vector<16x256xbf16>, vector<256x128xbf16>, vector<16x128xf32> -> vector<16x128xf32>
    %66 = vector.broadcast %6 : f32 to vector<16x128xf32>
    %67 = arith.mulf %66, %65 : vector<16x128xf32>
    %68 = arith.addf %58, %67 : vector<16x128xf32>
    %c5_49 = arith.constant 5 : index
    %c0_50 = arith.constant 0 : index
    %69 = vector.load %arg4[%c5_49, %c0_50] : memref<8x128xf32, #tpu.memory_space<vmem>>, vector<1x128xf32>
    %70 = vector.broadcast %6 : f32 to vector<1x128xf32>
    %71 = arith.mulf %70, %69 : vector<1x128xf32>
    %72 = arith.addf %62, %71 : vector<1x128xf32>
    %c7_51 = arith.constant 7 : index
    %c0_52 = arith.constant 0 : index
    %c0_53 = arith.constant 0 : index
    %73 = vector.load %arg3[%c7_51, %c0_52, %c0_53] : memref<9x256x128xbf16, #tpu.memory_space<vmem>>, vector<1x256x128xbf16>
    %74 = vector.shape_cast %73 : vector<1x256x128xbf16> to vector<256x128xbf16>
    %cst_54 = arith.constant dense<0.000000e+00> : vector<16x128xf32>
    %75 = tpu.matmul %0, %74, %cst_54 {dimension_numbers = #tpu.dot_dimension_numbers<[1], [0], [0], [1], [0, 0, 1, 1], [], []>} : vector<16x256xbf16>, vector<256x128xbf16>, vector<16x128xf32> -> vector<16x128xf32>
    %76 = vector.broadcast %7 : f32 to vector<16x128xf32>
    %77 = arith.mulf %76, %75 : vector<16x128xf32>
    %78 = arith.addf %68, %77 : vector<16x128xf32>
    %c6_55 = arith.constant 6 : index
    %c0_56 = arith.constant 0 : index
    %79 = vector.load %arg4[%c6_55, %c0_56] : memref<8x128xf32, #tpu.memory_space<vmem>>, vector<1x128xf32>
    %80 = vector.broadcast %7 : f32 to vector<1x128xf32>
    %81 = arith.mulf %80, %79 : vector<1x128xf32>
    %82 = arith.addf %72, %81 : vector<1x128xf32>
    %c8 = arith.constant 8 : index
    %c0_57 = arith.constant 0 : index
    %c0_58 = arith.constant 0 : index
    %83 = vector.load %arg3[%c8, %c0_57, %c0_58] : memref<9x256x128xbf16, #tpu.memory_space<vmem>>, vector<1x256x128xbf16>
    %84 = vector.shape_cast %83 : vector<1x256x128xbf16> to vector<256x128xbf16>
    %cst_59 = arith.constant dense<0.000000e+00> : vector<16x128xf32>
    %85 = tpu.matmul %0, %84, %cst_59 {dimension_numbers = #tpu.dot_dimension_numbers<[1], [0], [0], [1], [0, 0, 1, 1], [], []>} : vector<16x256xbf16>, vector<256x128xbf16>, vector<16x128xf32> -> vector<16x128xf32>
    %86 = vector.broadcast %8 : f32 to vector<16x128xf32>
    %87 = arith.mulf %86, %85 : vector<16x128xf32>
    %88 = arith.addf %78, %87 : vector<16x128xf32>
    %c7_60 = arith.constant 7 : index
    %c0_61 = arith.constant 0 : index
    %89 = vector.load %arg4[%c7_60, %c0_61] : memref<8x128xf32, #tpu.memory_space<vmem>>, vector<1x128xf32>
    %90 = vector.broadcast %8 : f32 to vector<1x128xf32>
    %91 = arith.mulf %90, %89 : vector<1x128xf32>
    %92 = arith.addf %82, %91 : vector<1x128xf32>
    %93 = vector.broadcast %92 : vector<1x128xf32> to vector<16x128xf32>
    %94 = arith.addf %88, %93 : vector<16x128xf32>
    %c0_62 = arith.constant 0 : index
    %c0_63 = arith.constant 0 : index
    %95 = vector.load %arg6[%c0_62, %c0_63] : memref<16x128xf32, #tpu.memory_space<vmem>>, vector<16x128xf32>
    tpu.vector_store %arg6[%c0_62, %c0_63], %94 {strides = array<i32>} : memref<16x128xf32, #tpu.memory_space<vmem>>, vector<16x128xf32>,
    return
  }
  func.func @transform_0(%arg0: i32) -> (i32, i32) {
    %c0_i32 = arith.constant 0 : i32
    %c0_i32_0 = arith.constant 0 : i32
    %c0_i32_1 = arith.constant 0 : i32
    return %c0_i32, %c0_i32_0 : i32, i32
  }
  func.func @transform_1(%arg0: i32) -> (i32, i32) {
    %c0_i32 = arith.constant 0 : i32
    %c0_i32_0 = arith.constant 0 : i32
    %c0_i32_1 = arith.constant 0 : i32
    return %c0_i32, %c0_i32_0 : i32, i32
  }
  func.func @transform_2(%arg0: i32) -> (i32, i32, i32) {
    %c0_i32 = arith.constant 0 : i32
    %c0_i32_0 = arith.constant 0 : i32
    %c0_i32_1 = arith.constant 0 : i32
    return %c0_i32, %c0_i32_0, %arg0 : i32, i32, i32
  }
  func.func @transform_3(%arg0: i32) -> (i32, i32) {
    %c0_i32 = arith.constant 0 : i32
    %c0_i32_0 = arith.constant 0 : i32
    return %c0_i32, %arg0 : i32, i32
  }
  func.func @transform_4(%arg0: i32) -> (i32, i32) {
    %c0_i32 = arith.constant 0 : i32
    %c0_i32_0 = arith.constant 0 : i32
    return %c0_i32, %arg0 : i32, i32
  }
  func.func @transform_5(%arg0: i32) -> (i32, i32) {
    %c0_i32 = arith.constant 0 : i32
    %c0_i32_0 = arith.constant 0 : i32
    return %c0_i32, %arg0 : i32, i32
  }
}

</mosaic_0001>

<llo_original>
// kernel: tpu_custom_call.1
$region0: #{tpu_custom_call.1}
  #allocation0 [shape = 'u32[]', space=smem, size = 0x4, offset = 0x4, fixed_abs, tag = 'smem constant byte address 0x4 - core index']
  #allocation1 [shape = 'u32[144,128]{1,0:T(1,128)}', space=vmem, size = 0x12000, scoped, tag = 'internal scratch']
  %s0 = inlined_call_operand.hbm [shape: f32[1,8], index: 0, kind: input, shape index: {}]
  %s1 = inlined_call_operand.hbm [shape: bf16[16,256], index: 1, kind: input, shape index: {}]
  %s2 = inlined_call_operand.hbm [shape: bf16[9,256,512], index: 2, kind: input, shape index: {}]
  %s3 = inlined_call_operand.hbm [shape: f32[8,512], index: 3, kind: input, shape index: {}]
  %s4 = inlined_call_operand.hbm [shape: f32[1,512], index: 4, kind: input, shape index: {}]
  %s5 = inlined_call_operand.hbm [shape: f32[16,512], index: 5, kind: output, shape index: {}]
  %s6 = sld [smem:[#allocation0]]
  $region73: #{tpu_custom_call.1} parent=0
    _
  %s8 = ssub.s32 1, %s6
  %s9 = scalar_select 0, %s8, %s6
  $region1: #{tpu_custom_call.1} parent=0
    #allocation2 [shape = 'u8[512]{0}', space=smem, size = 0x200, scoped, tag = 'input window, operand 0, single buffered']
    #allocation3 [shape = 's32[2]{0}', space=sflag, size = 0x8, scoped, tag = 'scoped memory for tpu_custom_call.1']
    #allocation4 [shape = 's32[2]{0}', space=sflag, size = 0x8, scoped, tag = 'scoped memory for tpu_custom_call.1']
    #allocation5 [shape = 's32[2]{0}', space=sflag, size = 0x8, scoped, tag = 'scoped memory for tpu_custom_call.1']
    #allocation6 [shape = 'u8[8192]{0}', space=vmem, size = 0x2000, scoped, tag = 'input window, operand 1, single buffered']
    #allocation7 [shape = 'u8[1179648]{0}', space=vmem, size = 0x120000, scoped, tag = 'input window, operand 2']
    #allocation8 [shape = 's32[2]{0}', space=sflag, size = 0x8, scoped, tag = 'scoped memory for tpu_custom_call.1']
    #allocation9 [shape = 'u8[8192]{0}', space=vmem, size = 0x2000, scoped, tag = 'input window, operand 3']
    #allocation10 [shape = 'u8[1024]{0}', space=vmem, size = 0x400, scoped, tag = 'input window, operand 4']
    #allocation11 [shape = 's32[2]{0}', space=sflag, size = 0x8, scoped, tag = 'scoped memory for tpu_custom_call.1']
    #allocation12 [shape = 'u8[16384]{0}', space=vmem, size = 0x4000, scoped, tag = 'output window, operand 0']
    %10 = vsyncpa [#allocation5], 0
    %11 = vsyncpa [#allocation3], 0
    %12 = vsyncpa [#allocation8], 0
    %s13 = scalar_lea.sflag [#allocation8], 1
    %14 = vsyncpa %s13, 0
    %15 = vsyncpa [#allocation11], 0
    %s16 = scalar_lea.sflag [#allocation11], 1
    %17 = vsyncpa %s16, 0
    %18 = vsyncpa [#allocation4], 0
    %s19 = scalar_lea.sflag [#allocation4], 1
    %20 = vsyncpa %s19, 0
    loop: start=0, step=1, limit=6
    $region2: #{tpu_custom_call.1} parent=1 // loop_pre_header
      _
    $region3: #{tpu_custom_call.1} parent=1 // loop_header
      %s22 = sphi 0, %s26
      %p23 = scmp.ge.s32.totalorder %s22, 6
      %s30 = sphi 0, %s30
      %s32 = sphi 0, %s30
      %s33 = sphi 0, %s32
      %s47 = sphi 0, %s33
      %s51 = sphi 0, %s51
      %s53 = sphi 0, %s51
      %s54 = sphi 0, %s53
      %s68 = sphi 0, %s54
      %s74 = sphi 0, %s76
      %s77 = sphi 0, %s74
      %s78 = sphi 0, %s77
      %s94 = sphi 0, %s78
      %s100 = sphi 0, %s102
      %s103 = sphi 0, %s100
      %s104 = sphi 0, %s103
      %s120 = sphi 0, %s104
      %s126 = sphi 0, %s128
      %s129 = sphi 0, %s126
      %s130 = sphi 0, %s129
      %s146 = sphi 0, %s130
      %s152 = sphi 0, %s154
      %s155 = sphi 0, %s152
      %s156 = sphi 0, %s155
      %s172 = sphi 0, %s156
    $region4: #{tpu_custom_call.1} parent=1 // loop_header_branch
      %25 = sbr.rel (%p23) target = $region8
    $region5: #{tpu_custom_call.1} parent=1 // loop_body
      %s27 = ssub.s32 %s22, 1
      %s28 = ssub.s32 %s22, 2
      %s29 = sadd.s32 %s22, 1
      %s31 = sadd.s32 %s30, 1
      %p34 = scmp.eq.s32.totalorder %s22, 3
      %p35 = scmp.ne.s32.totalorder %s30, %s32
      %p36 = scmp.eq.s32.totalorder %s22, 0
      %p37 = por %p35, %p36
      %p38 = scmp.ne.s32.totalorder %s30, %s32
      %p39 = scmp.eq.s32.totalorder %s27, 3
      %p40 = por %p38, %p39
      %p41 = scmp.ne.s32.totalorder %s32, %s33
      %p42 = scmp.eq.s32.totalorder %s27, 0
      %p43 = por %p41, %p42
      %p44 = scmp.ne.s32.totalorder %s32, %s33
      %p45 = scmp.eq.s32.totalorder %s28, 3
      %p46 = por %p44, %p45
      %p48 = scmp.ne.s32.totalorder %s33, %s47
      %p49 = scmp.eq.s32.totalorder %s28, 0
      %p50 = por %p48, %p49
      %s52 = sadd.s32 %s51, 1
      %p55 = scmp.eq.s32.totalorder %s22, 3
      %p56 = scmp.ne.s32.totalorder %s51, %s53
      %p57 = scmp.eq.s32.totalorder %s22, 0
      %p58 = por %p56, %p57
      %p59 = scmp.ne.s32.totalorder %s51, %s53
      %p60 = scmp.eq.s32.totalorder %s27, 3
      %p61 = por %p59, %p60
      %p62 = scmp.ne.s32.totalorder %s53, %s54
      %p63 = scmp.eq.s32.totalorder %s27, 0
      %p64 = por %p62, %p63
      %p65 = scmp.ne.s32.totalorder %s53, %s54
      %p66 = scmp.eq.s32.totalorder %s28, 3
      %p67 = por %p65, %p66
      %p69 = scmp.ne.s32.totalorder %s54, %s68
      %p70 = scmp.eq.s32.totalorder %s28, 0
      %p71 = por %p69, %p70
      %s72 = ssub.s32 %s22, %s29
      %p73 = scmp.eq.s32.totalorder %s72, 0
      %s75 = sadd.s32 %s74, 1
      %s76 = scalar_select %p73, %s74, %s75
      %p79 = pneg %p73
      %p80 = scmp.eq.s32.totalorder %s22, 3
      %p81 = por %p79, %p80
      %p82 = scmp.ne.s32.totalorder %s74, %s77
      %p83 = scmp.eq.s32.totalorder %s22, 0
      %p84 = por %p82, %p83
      %p85 = scmp.ne.s32.totalorder %s74, %s77
      %p86 = scmp.eq.s32.totalorder %s27, 3
      %p87 = por %p85, %p86
      %p88 = scmp.ne.s32.totalorder %s77, %s78
      %p89 = scmp.eq.s32.totalorder %s27, 0
      %p90 = por %p88, %p89
      %p91 = scmp.ne.s32.totalorder %s77, %s78
      %p92 = scmp.eq.s32.totalorder %s28, 3
      %p93 = por %p91, %p92
      %p95 = scmp.ne.s32.totalorder %s78, %s94
      %p96 = scmp.eq.s32.totalorder %s28, 0
      %p97 = por %p95, %p96
      %s98 = ssub.s32 %s22, %s29
      %p99 = scmp.eq.s32.totalorder %s98, 0
      %s101 = sadd.s32 %s100, 1
      %s102 = scalar_select %p99, %s100, %s101
      %p105 = pneg %p99
      %p106 = scmp.eq.s32.totalorder %s22, 3
      %p107 = por %p105, %p106
      %p108 = scmp.ne.s32.totalorder %s100, %s103
      %p109 = scmp.eq.s32.totalorder %s22, 0
      %p110 = por %p108, %p109
      %p111 = scmp.ne.s32.totalorder %s100, %s103
      %p112 = scmp.eq.s32.totalorder %s27, 3
      %p113 = por %p111, %p112
      %p114 = scmp.ne.s32.totalorder %s103, %s104
      %p115 = scmp.eq.s32.totalorder %s27, 0
      %p116 = por %p114, %p115
      %p117 = scmp.ne.s32.totalorder %s103, %s104
      %p118 = scmp.eq.s32.totalorder %s28, 3
      %p119 = por %p117, %p118
      %p121 = scmp.ne.s32.totalorder %s104, %s120
      %p122 = scmp.eq.s32.totalorder %s28, 0
      %p123 = por %p121, %p122
      %s124 = ssub.s32 %s22, %s29
      %p125 = scmp.eq.s32.totalorder %s124, 0
      %s127 = sadd.s32 %s126, 1
      %s128 = scalar_select %p125, %s126, %s127
      %p131 = pneg %p125
      %p132 = scmp.eq.s32.totalorder %s22, 3
      %p133 = por %p131, %p132
      %p134 = scmp.ne.s32.totalorder %s126, %s129
      %p135 = scmp.eq.s32.totalorder %s22, 0
      %p136 = por %p134, %p135
      %p137 = scmp.ne.s32.totalorder %s126, %s129
      %p138 = scmp.eq.s32.totalorder %s27, 3
      %p139 = por %p137, %p138
      %p140 = scmp.ne.s32.totalorder %s129, %s130
      %p141 = scmp.eq.s32.totalorder %s27, 0
      %p142 = por %p140, %p141
      %p143 = scmp.ne.s32.totalorder %s129, %s130
      %p144 = scmp.eq.s32.totalorder %s28, 3
      %p145 = por %p143, %p144
      %p147 = scmp.ne.s32.totalorder %s130, %s146
      %p148 = scmp.eq.s32.totalorder %s28, 0
      %p149 = por %p147, %p148
      %s150 = ssub.s32 %s22, %s29
      %p151 = scmp.eq.s32.totalorder %s150, 0
      %s153 = sadd.s32 %s152, 1
      %s154 = scalar_select %p151, %s152, %s153
      %p157 = pneg %p151
      %p158 = scmp.eq.s32.totalorder %s22, 3
      %p159 = por %p157, %p158
      %p160 = scmp.ne.s32.totalorder %s152, %s155
      %p161 = scmp.eq.s32.totalorder %s22, 0
      %p162 = por %p160, %p161
      %p163 = scmp.ne.s32.totalorder %s152, %s155
      %p164 = scmp.eq.s32.totalorder %s27, 3
      %p165 = por %p163, %p164
      %p166 = scmp.ne.s32.totalorder %s155, %s156
      %p167 = scmp.eq.s32.totalorder %s27, 0
      %p168 = por %p166, %p167
      %p169 = scmp.ne.s32.totalorder %s155, %s156
      %p170 = scmp.eq.s32.totalorder %s28, 3
      %p171 = por %p169, %p170
      %p173 = scmp.ne.s32.totalorder %s156, %s172
      %p174 = scmp.eq.s32.totalorder %s28, 0
      %p175 = por %p173, %p174
      %p176 = scmp.le.s32.totalorder 1, %s22
      %p177 = scmp.lt.s32.totalorder %s22, 5
      %p178 = pnand %p176, %p177
      %p179 = pneg %p178
      // Predicated region
      $region9: #{tpu_custom_call.1} parent=5 // pred_check
        _
      $region10: #{tpu_custom_call.1} parent=5 // pred_check_branch
        %181 = sbr.rel (%p178) target = $region12
      $region11: #{tpu_custom_call.1} parent=5 // pred_region
        %s182 = ssub.s32 %s22, 1
        // Predicated region
        $region13: #{tpu_custom_call.1} parent=11 // pred_check
          %p183 = pneg %p43
        $region14: #{tpu_custom_call.1} parent=11 // pred_check_branch
          %185 = sbr.rel (%p183) target = $region16
        $region15: #{tpu_custom_call.1} parent=11 // pred_region
          %s187 = ssub.s32 16, 16
          %188 = vsyncadd [#allocation5], %s187
          %191 = dma.hbm_to_smem %s0, 16, [#allocation2], [#allocation5]
        $region16: #{tpu_custom_call.1} parent=11 // pred_fallthru
          _
        // Predicated region
        $region17: #{tpu_custom_call.1} parent=11 // pred_check
          %p192 = pneg %p64
        $region18: #{tpu_custom_call.1} parent=11 // pred_check_branch
          %194 = sbr.rel (%p192) target = $region20
        $region19: #{tpu_custom_call.1} parent=11 // pred_region
          %s196 = ssub.s32 256, 256
          %197 = vsyncadd [#allocation3], %s196
          %s198 = sshll.u32 [#allocation6], 4
          %s199 = int_to_ptr.vmem [resolvable:$true] %s198
          %204 = dma.hbm_to_vmem [thread:$0]  %s1, 256, %s199, [#allocation3], 128, 128, 8
        $region20: #{tpu_custom_call.1} parent=11 // pred_fallthru
          _
      $region12: #{tpu_custom_call.1} parent=5 // pred_fallthru
        _
      %p205 = scmp.lt.s32.totalorder %s22, 4
      // Predicated region
      $region21: #{tpu_custom_call.1} parent=5 // pred_check
        %p206 = pneg %p205
      $region22: #{tpu_custom_call.1} parent=5 // pred_check_branch
        %208 = sbr.rel (%p206) target = $region24
      $region23: #{tpu_custom_call.1} parent=5 // pred_region
        // Predicated region
        $region25: #{tpu_custom_call.1} parent=23 // pred_check
          %p209 = pneg %p84
        $region26: #{tpu_custom_call.1} parent=23 // pred_check_branch
          %211 = sbr.rel (%p209) target = $region28
        $region27: #{tpu_custom_call.1} parent=23 // pred_region
          %s212 = sand.u32 %s22, 1
          %s213 = scalar_lea.sflag [#allocation8], %s212
          %s214 = sand.u32 %s74, 1
          %s215 = smul.addr %s214, 1152
          %s216 = scalar_lea.vmem [#allocation7], %s215
          %s218 = ssub.s32 18432, 18432
          %219 = vsyncadd %s213, %s218
          %s220 = smul.addr %s22, 64
          %s221 = scalar_lea.hbm %s2, %s220
          %s222 = sshll.u32 %s216, 4
          %s223 = int_to_ptr.vmem [resolvable:$true] %s222
          %228 = dma.hbm_to_vmem [thread:$0]  %s221, 18432, %s223, %s213, 256, 64, 4
        $region28: #{tpu_custom_call.1} parent=23 // pred_fallthru
          _
        // Predicated region
        $region29: #{tpu_custom_call.1} parent=23 // pred_check
          %p229 = pneg %p110
        $region30: #{tpu_custom_call.1} parent=23 // pred_check_branch
          %231 = sbr.rel (%p229) target = $region32
        $region31: #{tpu_custom_call.1} parent=23 // pred_region
          %s232 = sand.u32 %s22, 1
          %s233 = scalar_lea.sflag [#allocation8], %s232
          %s234 = sand.u32 %s100, 1
          %s235 = smul.addr %s234, 8
          %s236 = scalar_lea.vmem [#allocation9], %s235
          %s238 = ssub.s32 128, 128
          %239 = vsyncadd %s233, %s238
          %s240 = smul.addr %s22, 128
          %s241 = scalar_lea.hbm %s3, %s240
          %s243 = sshll.u32 %s236, 4
          %s244 = int_to_ptr.vmem [resolvable:$true] %s243
          %246 = dma.hbm_to_vmem [thread:$0]  %s241, 128, %s244, %s233
        $region32: #{tpu_custom_call.1} parent=23 // pred_fallthru
          _
        // Predicated region
        $region33: #{tpu_custom_call.1} parent=23 // pred_check
          %p247 = pneg %p136
        $region34: #{tpu_custom_call.1} parent=23 // pred_check_branch
          %249 = sbr.rel (%p247) target = $region36
        $region35: #{tpu_custom_call.1} parent=23 // pred_region
          %s250 = sand.u32 %s126, 1
          %s251 = scalar_lea.sflag [#allocation11], %s250
          %s252 = sand.u32 %s126, 1
          %s253 = scalar_lea.vmem [#allocation10], %s252
          %s255 = ssub.s32 16, 16
          %256 = vsyncadd %s251, %s255
          %s257 = smul.addr %s22, 16
          %s258 = scalar_lea.hbm %s4, %s257
          %s260 = sshll.u32 %s253, 4
          %s261 = int_to_ptr.vmem [resolvable:$true] %s260
          %263 = dma.hbm_to_vmem [thread:$0]  %s258, 16, %s261, %s251
        $region36: #{tpu_custom_call.1} parent=23 // pred_fallthru
          _
      $region24: #{tpu_custom_call.1} parent=5 // pred_fallthru
        _
      %p264 = scmp.le.s32.totalorder 1, %s22
      %p265 = scmp.lt.s32.totalorder %s22, 5
      %p266 = pnand %p264, %p265
      %p267 = pneg %p266
      // Predicated region
      $region37: #{tpu_custom_call.1} parent=5 // pred_check
        _
      $region38: #{tpu_custom_call.1} parent=5 // pred_check_branch
        %269 = sbr.rel (%p266) target = $region40
      $region39: #{tpu_custom_call.1} parent=5 // pred_region
        %s270 = ssub.s32 %s22, 1
        // Predicated region
        $region41: #{tpu_custom_call.1} parent=39 // pred_check
          %p271 = pneg %p43
        $region42: #{tpu_custom_call.1} parent=39 // pred_check_branch
          %273 = sbr.rel (%p271) target = $region44
        $region43: #{tpu_custom_call.1} parent=39 // pred_region
          %274 = dma.done [#allocation5], 16
        $region44: #{tpu_custom_call.1} parent=39 // pred_fallthru
          _
        // Predicated region
        $region45: #{tpu_custom_call.1} parent=39 // pred_check
          %p275 = pneg %p64
        $region46: #{tpu_custom_call.1} parent=39 // pred_check_branch
          %277 = sbr.rel (%p275) target = $region48
        $region47: #{tpu_custom_call.1} parent=39 // pred_region
          %278 = dma.done [#allocation3], 256
        $region48: #{tpu_custom_call.1} parent=39 // pred_fallthru
          _
        %s279 = sand.u32 %s27, 1
        %s280 = scalar_lea.sflag [#allocation8], %s279
        %s281 = sand.u32 %s77, 1
        %s282 = smul.addr %s281, 1152
        %s283 = scalar_lea.vmem [#allocation7], %s282
        // Predicated region
        $region49: #{tpu_custom_call.1} parent=39 // pred_check
          %p284 = pneg %p90
        $region50: #{tpu_custom_call.1} parent=39 // pred_check_branch
          %286 = sbr.rel (%p284) target = $region52
        $region51: #{tpu_custom_call.1} parent=39 // pred_region
          %287 = dma.done %s280, 18432
        $region52: #{tpu_custom_call.1} parent=39 // pred_fallthru
          _
        %s288 = sand.u32 %s27, 1
        %s289 = scalar_lea.sflag [#allocation8], %s288
        %s290 = sand.u32 %s103, 1
        %s291 = smul.addr %s290, 8
        %s292 = scalar_lea.vmem [#allocation9], %s291
        // Predicated region
        $region53: #{tpu_custom_call.1} parent=39 // pred_check
          %p293 = pneg %p116
        $region54: #{tpu_custom_call.1} parent=39 // pred_check_branch
          %295 = sbr.rel (%p293) target = $region56
        $region55: #{tpu_custom_call.1} parent=39 // pred_region
          %296 = dma.done %s289, 128
        $region56: #{tpu_custom_call.1} parent=39 // pred_fallthru
          _
        %s297 = sand.u32 %s129, 1
        %s298 = scalar_lea.sflag [#allocation11], %s297
        %s299 = sand.u32 %s129, 1
        %s300 = scalar_lea.vmem [#allocation10], %s299
        // Predicated region
        $region57: #{tpu_custom_call.1} parent=39 // pred_check
          %p301 = pneg %p142
        $region58: #{tpu_custom_call.1} parent=39 // pred_check_branch
          %303 = sbr.rel (%p301) target = $region60
        $region59: #{tpu_custom_call.1} parent=39 // pred_region
          %304 = dma.done %s298, 16
        $region60: #{tpu_custom_call.1} parent=39 // pred_fallthru
          _
        %305 = sfence
        %p306 = pneg %p43
        %p307 = pneg %p40
        %p308 = pneg %p64
        %p309 = pneg %p61
        %s310 = sand.u32 %s27, 1
        %s311 = scalar_lea.sflag [#allocation8], %s310
        %s312 = sand.u32 %s77, 1
        %s313 = smul.addr %s312, 1152
        %s314 = scalar_lea.vmem [#allocation7], %s313
        %p315 = pneg %p90
        %p316 = pneg %p87
        %s317 = sand.u32 %s27, 1
        %s318 = scalar_lea.sflag [#allocation8], %s317
        %s319 = sand.u32 %s103, 1
        %s320 = smul.addr %s319, 8
        %s321 = scalar_lea.vmem [#allocation9], %s320
        %p322 = pneg %p116
        %p323 = pneg %p113
        %s324 = sand.u32 %s129, 1
        %s325 = scalar_lea.sflag [#allocation11], %s324
        %s326 = sand.u32 %s129, 1
        %s327 = scalar_lea.vmem [#allocation10], %s326
        %p328 = pneg %p142
        %p329 = pneg %p139
        %p330 = pneg %p168
        %p331 = pneg %p165
        %s332 = sand.u32 %s155, 1
        %s333 = scalar_lea.sflag [#allocation4], %s332
        %s334 = sand.u32 %s155, 1
        %s335 = smul.addr %s334, 16
        %s336 = scalar_lea.vmem [#allocation12], %s335
        %v338 = vld [vmem:[#allocation6] sm:$0xff]
        %v339 = vld [vmem:[#allocation6 + $0x8] sm:$0xff]
        %s340 = sld [smem:[#allocation2]]
        %s341 = sld [smem:[#allocation2 + $0x1]]
        %s342 = sld [smem:[#allocation2 + $0x2]]
        %s343 = sld [smem:[#allocation2 + $0x3]]
        %s344 = sld [smem:[#allocation2 + $0x4]]
        %s345 = sld [smem:[#allocation2 + $0x5]]
        %s346 = sld [smem:[#allocation2 + $0x6]]
        %s347 = sld [smem:[#allocation2 + $0x7]]
        %v348 = vld [vmem:[%s283] sm:$0xf]
        %v349 = vld [vmem:[%s283 + $0x4] sm:$0xf]
        %v350 = vld [vmem:[%s283 + $0x8] sm:$0xf]
        %v351 = vld [vmem:[%s283 + $0xc] sm:$0xf]
        %v352 = vld [vmem:[%s283 + $0x10] sm:$0xf]
        %v353 = vld [vmem:[%s283 + $0x14] sm:$0xf]
        %v354 = vld [vmem:[%s283 + $0x18] sm:$0xf]
        %v355 = vld [vmem:[%s283 + $0x1c] sm:$0xf]
        %v356 = vld [vmem:[%s283 + $0x20] sm:$0xf]
        %v357 = vld [vmem:[%s283 + $0x24] sm:$0xf]
        %v358 = vld [vmem:[%s283 + $0x28] sm:$0xf]
        %v359 = vld [vmem:[%s283 + $0x2c] sm:$0xf]
        %v360 = vld [vmem:[%s283 + $0x30] sm:$0xf]
        %v361 = vld [vmem:[%s283 + $0x34] sm:$0xf]
        %v362 = vld [vmem:[%s283 + $0x38] sm:$0xf]
        %v363 = vld [vmem:[%s283 + $0x3c] sm:$0xf]
        %v364 = vld [vmem:[%s283 + $0x40] sm:$0xf]
        %v365 = vld [vmem:[%s283 + $0x44] sm:$0xf]
        %v366 = vld [vmem:[%s283 + $0x48] sm:$0xf]
        %v367 = vld [vmem:[%s283 + $0x4c] sm:$0xf]
        %v368 = vld [vmem:[%s283 + $0x50] sm:$0xf]
        %v369 = vld [vmem:[%s283 + $0x54] sm:$0xf]
        %v370 = vld [vmem:[%s283 + $0x58] sm:$0xf]
        %v371 = vld [vmem:[%s283 + $0x5c] sm:$0xf]
        %v372 = vld [vmem:[%s283 + $0x60] sm:$0xf]
        %v373 = vld [vmem:[%s283 + $0x64] sm:$0xf]
        %v374 = vld [vmem:[%s283 + $0x68] sm:$0xf]
        %v375 = vld [vmem:[%s283 + $0x6c] sm:$0xf]
        %v376 = vld [vmem:[%s283 + $0x70] sm:$0xf]
        %v377 = vld [vmem:[%s283 + $0x74] sm:$0xf]
        %v378 = vld [vmem:[%s283 + $0x78] sm:$0xf]
        %v379 = vld [vmem:[%s283 + $0x7c] sm:$0xf]
        %v380 = vld [vmem:[%s300] sm:$0x1]
        %s381 = scalar_lea.vmem %s283, 128 [#allocation7]
        %v382 = vld [vmem:[%s381] sm:$0xf]
        %v383 = vld [vmem:[%s381 + $0x4] sm:$0xf]
        %v384 = vld [vmem:[%s381 + $0x8] sm:$0xf]
        %v385 = vld [vmem:[%s381 + $0xc] sm:$0xf]
        %v386 = vld [vmem:[%s381 + $0x10] sm:$0xf]
        %v387 = vld [vmem:[%s381 + $0x14] sm:$0xf]
        %v388 = vld [vmem:[%s381 + $0x18] sm:$0xf]
        %v389 = vld [vmem:[%s381 + $0x1c] sm:$0xf]
        %v390 = vld [vmem:[%s381 + $0x20] sm:$0xf]
        %v391 = vld [vmem:[%s381 + $0x24] sm:$0xf]
        %v392 = vld [vmem:[%s381 + $0x28] sm:$0xf]
        %v393 = vld [vmem:[%s381 + $0x2c] sm:$0xf]
        %v394 = vld [vmem:[%s381 + $0x30] sm:$0xf]
        %v395 = vld [vmem:[%s381 + $0x34] sm:$0xf]
        %v396 = vld [vmem:[%s381 + $0x38] sm:$0xf]
        %v397 = vld [vmem:[%s381 + $0x3c] sm:$0xf]
        %v398 = vld [vmem:[%s381 + $0x40] sm:$0xf]
        %v399 = vld [vmem:[%s381 + $0x44] sm:$0xf]
        %v400 = vld [vmem:[%s381 + $0x48] sm:$0xf]
        %v401 = vld [vmem:[%s381 + $0x4c] sm:$0xf]
        %v402 = vld [vmem:[%s381 + $0x50] sm:$0xf]
        %v403 = vld [vmem:[%s381 + $0x54] sm:$0xf]
        %v404 = vld [vmem:[%s381 + $0x58] sm:$0xf]
        %v405 = vld [vmem:[%s381 + $0x5c] sm:$0xf]
        %v406 = vld [vmem:[%s381 + $0x60] sm:$0xf]
        %v407 = vld [vmem:[%s381 + $0x64] sm:$0xf]
        %v408 = vld [vmem:[%s381 + $0x68] sm:$0xf]
        %v409 = vld [vmem:[%s381 + $0x6c] sm:$0xf]
        %v410 = vld [vmem:[%s381 + $0x70] sm:$0xf]
        %v411 = vld [vmem:[%s381 + $0x74] sm:$0xf]
        %v412 = vld [vmem:[%s381 + $0x78] sm:$0xf]
        %v413 = vld [vmem:[%s381 + $0x7c] sm:$0xf]
        %v416 = vunpack.c.l.b16 %v338
        %v417 = vunpack.c.h.b16 %v338
        %v418 = vunpack.c.l.b16 %v339
        %v419 = vunpack.c.h.b16 %v339
        %v420 = vpack.c.b16 %v418, %v416
        %v421 = vpack.c.b16 %v419, %v417
        %v456 = vunpack.c.l.b16 %v382
        %v457 = vunpack.c.l.b16 %v383
        %v458 = vunpack.c.l.b16 %v384
        %v459 = vunpack.c.l.b16 %v385
        %v460 = vunpack.c.l.b16 %v386
        %v461 = vunpack.c.l.b16 %v387
        %v462 = vunpack.c.l.b16 %v388
        %v463 = vunpack.c.l.b16 %v389
        %v464 = vunpack.c.l.b16 %v390
        %v465 = vunpack.c.l.b16 %v391
        %v466 = vunpack.c.l.b16 %v392
        %v467 = vunpack.c.l.b16 %v393
        %v468 = vunpack.c.l.b16 %v394
        %v469 = vunpack.c.l.b16 %v395
        %v470 = vunpack.c.l.b16 %v396
        %v471 = vunpack.c.l.b16 %v397
        %v472 = vunpack.c.l.b16 %v398
        %v473 = vunpack.c.l.b16 %v399
        %v474 = vunpack.c.l.b16 %v400
        %v475 = vunpack.c.l.b16 %v401
        %v476 = vunpack.c.l.b16 %v402
        %v477 = vunpack.c.l.b16 %v403
        %v478 = vunpack.c.l.b16 %v404
        %v479 = vunpack.c.l.b16 %v405
        %v480 = vunpack.c.l.b16 %v406
        %v481 = vunpack.c.l.b16 %v407
        %v482 = vunpack.c.l.b16 %v408
        %v483 = vunpack.c.l.b16 %v409
        %v484 = vunpack.c.l.b16 %v410
        %v485 = vunpack.c.l.b16 %v411
        %v486 = vunpack.c.l.b16 %v412
        %v487 = vunpack.c.l.b16 %v413
        %v488 = vpack.c.b16 %v457, %v456
        %v489 = vpack.c.b16 %v459, %v458
        %v490 = vpack.c.b16 %v461, %v460
        %v491 = vpack.c.b16 %v463, %v462
        %v492 = vpack.c.b16 %v465, %v464
        %v493 = vpack.c.b16 %v467, %v466
        %v494 = vpack.c.b16 %v469, %v468
        %v495 = vpack.c.b16 %v471, %v470
        %v496 = vpack.c.b16 %v473, %v472
        %v497 = vpack.c.b16 %v475, %v474
        %v498 = vpack.c.b16 %v477, %v476
        %v499 = vpack.c.b16 %v479, %v478
        %v500 = vpack.c.b16 %v481, %v480
        %v501 = vpack.c.b16 %v483, %v482
        %v502 = vpack.c.b16 %v485, %v484
        %v503 = vpack.c.b16 %v487, %v486
        %520 = vmatprep.subr.bf16.mxu0 0
        %521 = vmatpush1.bf16.msra.mxu0 %v488
        %522 = vmatprep.subr.bf16.mxu0 0
        %523 = vmatpush1.bf16.msra.mxu0 %v489
        %524 = vmatprep.subr.bf16.mxu0 0
        %525 = vmatpush1.bf16.msra.mxu0 %v490
        %526 = vmatprep.subr.bf16.mxu0 0
        %527 = vmatpush1.bf16.msra.mxu0 %v491
        %528 = vmatprep.subr.bf16.mxu0 0
        %529 = vmatpush1.bf16.msra.mxu0 %v492
        %530 = vmatprep.subr.bf16.mxu0 0
        %531 = vmatpush1.bf16.msra.mxu0 %v493
        %532 = vmatprep.subr.bf16.mxu0 0
        %533 = vmatpush1.bf16.msra.mxu0 %v494
        %534 = vmatprep.subr.bf16.mxu0 0
        %535 = vmatpush1.bf16.msra.mxu0 %v495
        %536 = vmatprep.subr.bf16.mxu0 0
        %537 = vmatpush1.bf16.msra.mxu0 %v496
        %538 = vmatprep.subr.bf16.mxu0 0
        %539 = vmatpush1.bf16.msra.mxu0 %v497
        %540 = vmatprep.subr.bf16.mxu0 0
        %541 = vmatpush1.bf16.msra.mxu0 %v498
        %542 = vmatprep.subr.bf16.mxu0 0
        %543 = vmatpush1.bf16.msra.mxu0 %v499
        %544 = vmatprep.subr.bf16.mxu0 0
        %545 = vmatpush1.bf16.msra.mxu0 %v500
        %546 = vmatprep.subr.bf16.mxu0 0
        %547 = vmatpush1.bf16.msra.mxu0 %v501
        %548 = vmatprep.subr.bf16.mxu0 0
        %549 = vmatpush1.bf16.msra.mxu0 %v502
        %550 = vmatprep.subr.bf16.mxu0 0
        %551 = vmatpush1.bf16.msra.mxu0 %v503
        %552 = vmatprep.mubr.bf16.mxu0 %v421
        %553 = vmatmul.mubr.bf16.gmra.mrb[0].mxu0 %v420
        %v554 = vpop.f32.mrb[0].mxu0
        %v555 = vadd.f32 0.0, %v554
        %v556 = vpop.f32.mrb[0].mxu0
        %v557 = vpop.f32.mrb[0].mxu0
        %v558 = vadd.f32 0.0, %v557
        %v559 = vpop.f32.mrb[0].mxu0
        %560 = vdwg.mxu0
        %v561 = vstv %s340
        %v562 = vmul.f32 %v561, %v555
        %v563 = vmul.f32 %v561, %v558
        %v596 = vunpack.c.l.b16 %v348
        %v597 = vunpack.c.l.b16 %v349
        %v598 = vunpack.c.l.b16 %v350
        %v599 = vunpack.c.l.b16 %v351
        %v600 = vunpack.c.l.b16 %v352
        %v601 = vunpack.c.l.b16 %v353
        %v602 = vunpack.c.l.b16 %v354
        %v603 = vunpack.c.l.b16 %v355
        %v604 = vunpack.c.l.b16 %v356
        %v605 = vunpack.c.l.b16 %v357
        %v606 = vunpack.c.l.b16 %v358
        %v607 = vunpack.c.l.b16 %v359
        %v608 = vunpack.c.l.b16 %v360
        %v609 = vunpack.c.l.b16 %v361
        %v610 = vunpack.c.l.b16 %v362
        %v611 = vunpack.c.l.b16 %v363
        %v612 = vunpack.c.l.b16 %v364
        %v613 = vunpack.c.l.b16 %v365
        %v614 = vunpack.c.l.b16 %v366
        %v615 = vunpack.c.l.b16 %v367
        %v616 = vunpack.c.l.b16 %v368
        %v617 = vunpack.c.l.b16 %v369
        %v618 = vunpack.c.l.b16 %v370
        %v619 = vunpack.c.l.b16 %v371
        %v620 = vunpack.c.l.b16 %v372
        %v621 = vunpack.c.l.b16 %v373
        %v622 = vunpack.c.l.b16 %v374
        %v623 = vunpack.c.l.b16 %v375
        %v624 = vunpack.c.l.b16 %v376
        %v625 = vunpack.c.l.b16 %v377
        %v626 = vunpack.c.l.b16 %v378
        %v627 = vunpack.c.l.b16 %v379
        %v628 = vpack.c.b16 %v597, %v596
        %v629 = vpack.c.b16 %v599, %v598
        %v630 = vpack.c.b16 %v601, %v600
        %v631 = vpack.c.b16 %v603, %v602
        %v632 = vpack.c.b16 %v605, %v604
        %v633 = vpack.c.b16 %v607, %v606
        %v634 = vpack.c.b16 %v609, %v608
        %v635 = vpack.c.b16 %v611, %v610
        %v636 = vpack.c.b16 %v613, %v612
        %v637 = vpack.c.b16 %v615, %v614
        %v638 = vpack.c.b16 %v617, %v616
        %v639 = vpack.c.b16 %v619, %v618
        %v640 = vpack.c.b16 %v621, %v620
        %v641 = vpack.c.b16 %v623, %v622
        %v642 = vpack.c.b16 %v625, %v624
        %v643 = vpack.c.b16 %v627, %v626
        %660 = vmatprep.subr.bf16.mxu0 0
        %661 = vmatpush1.bf16.msra.mxu0 %v628
        %662 = vmatprep.subr.bf16.mxu0 0
        %663 = vmatpush1.bf16.msra.mxu0 %v629
        %664 = vmatprep.subr.bf16.mxu0 0
        %665 = vmatpush1.bf16.msra.mxu0 %v630
        %666 = vmatprep.subr.bf16.mxu0 0
        %667 = vmatpush1.bf16.msra.mxu0 %v631
        %668 = vmatprep.subr.bf16.mxu0 0
        %669 = vmatpush1.bf16.msra.mxu0 %v632
        %670 = vmatprep.subr.bf16.mxu0 0
        %671 = vmatpush1.bf16.msra.mxu0 %v633
        %672 = vmatprep.subr.bf16.mxu0 0
        %673 = vmatpush1.bf16.msra.mxu0 %v634
        %674 = vmatprep.subr.bf16.mxu0 0
        %675 = vmatpush1.bf16.msra.mxu0 %v635
        %676 = vmatprep.subr.bf16.mxu0 0
        %677 = vmatpush1.bf16.msra.mxu0 %v636
        %678 = vmatprep.subr.bf16.mxu0 0
        %679 = vmatpush1.bf16.msra.mxu0 %v637
        %680 = vmatprep.subr.bf16.mxu0 0
        %681 = vmatpush1.bf16.msra.mxu0 %v638
        %682 = vmatprep.subr.bf16.mxu0 0
        %683 = vmatpush1.bf16.msra.mxu0 %v639
        %684 = vmatprep.subr.bf16.mxu0 0
        %685 = vmatpush1.bf16.msra.mxu0 %v640
        %686 = vmatprep.subr.bf16.mxu0 0
        %687 = vmatpush1.bf16.msra.mxu0 %v641
        %688 = vmatprep.subr.bf16.mxu0 0
        %689 = vmatpush1.bf16.msra.mxu0 %v642
        %690 = vmatprep.subr.bf16.mxu0 0
        %691 = vmatpush1.bf16.msra.mxu0 %v643
        %692 = vmatprep.mubr.bf16.mxu0 %v421
        %693 = vmatmul.mubr.bf16.gmra.mrb[0].mxu0 %v420
        %v694 = vpop.f32.mrb[0].mxu0
        %v695 = vadd.f32 %v562, %v694
        %v696 = vpop.f32.mrb[0].mxu0
        %v697 = vpop.f32.mrb[0].mxu0
        %v698 = vadd.f32 %v563, %v697
        %v699 = vpop.f32.mrb[0].mxu0
        %700 = vdwg.mxu0
        %v701 = vld [vmem:[%s292] sm:$0x1]
        %v702 = vmul.f32 %v561, %v701
        %v703 = vadd.f32 %v380, %v702
        %s704 = scalar_lea.vmem %s283, 256 [#allocation7]
        %v705 = vld [vmem:[%s704] sm:$0xf]
        %v706 = vld [vmem:[%s704 + $0x4] sm:$0xf]
        %v707 = vld [vmem:[%s704 + $0x8] sm:$0xf]
        %v708 = vld [vmem:[%s704 + $0xc] sm:$0xf]
        %v709 = vld [vmem:[%s704 + $0x10] sm:$0xf]
        %v710 = vld [vmem:[%s704 + $0x14] sm:$0xf]
        %v711 = vld [vmem:[%s704 + $0x18] sm:$0xf]
        %v712 = vld [vmem:[%s704 + $0x1c] sm:$0xf]
        %v713 = vld [vmem:[%s704 + $0x20] sm:$0xf]
        %v714 = vld [vmem:[%s704 + $0x24] sm:$0xf]
        %v715 = vld [vmem:[%s704 + $0x28] sm:$0xf]
        %v716 = vld [vmem:[%s704 + $0x2c] sm:$0xf]
        %v717 = vld [vmem:[%s704 + $0x30] sm:$0xf]
        %v718 = vld [vmem:[%s704 + $0x34] sm:$0xf]
        %v719 = vld [vmem:[%s704 + $0x38] sm:$0xf]
        %v720 = vld [vmem:[%s704 + $0x3c] sm:$0xf]
        %v721 = vld [vmem:[%s704 + $0x40] sm:$0xf]
        %v722 = vld [vmem:[%s704 + $0x44] sm:$0xf]
        %v723 = vld [vmem:[%s704 + $0x48] sm:$0xf]
        %v724 = vld [vmem:[%s704 + $0x4c] sm:$0xf]
        %v725 = vld [vmem:[%s704 + $0x50] sm:$0xf]
        %v726 = vld [vmem:[%s704 + $0x54] sm:$0xf]
        %v727 = vld [vmem:[%s704 + $0x58] sm:$0xf]
        %v728 = vld [vmem:[%s704 + $0x5c] sm:$0xf]
        %v729 = vld [vmem:[%s704 + $0x60] sm:$0xf]
        %v730 = vld [vmem:[%s704 + $0x64] sm:$0xf]
        %v731 = vld [vmem:[%s704 + $0x68] sm:$0xf]
        %v732 = vld [vmem:[%s704 + $0x6c] sm:$0xf]
        %v733 = vld [vmem:[%s704 + $0x70] sm:$0xf]
        %v734 = vld [vmem:[%s704 + $0x74] sm:$0xf]
        %v735 = vld [vmem:[%s704 + $0x78] sm:$0xf]
        %v736 = vld [vmem:[%s704 + $0x7c] sm:$0xf]
        %v769 = vunpack.c.l.b16 %v705
        %v770 = vunpack.c.l.b16 %v706
        %v771 = vunpack.c.l.b16 %v707
        %v772 = vunpack.c.l.b16 %v708
        %v773 = vunpack.c.l.b16 %v709
        %v774 = vunpack.c.l.b16 %v710
        %v775 = vunpack.c.l.b16 %v711
        %v776 = vunpack.c.l.b16 %v712
        %v777 = vunpack.c.l.b16 %v713
        %v778 = vunpack.c.l.b16 %v714
        %v779 = vunpack.c.l.b16 %v715
        %v780 = vunpack.c.l.b16 %v716
        %v781 = vunpack.c.l.b16 %v717
        %v782 = vunpack.c.l.b16 %v718
        %v783 = vunpack.c.l.b16 %v719
        %v784 = vunpack.c.l.b16 %v720
        %v785 = vunpack.c.l.b16 %v721
        %v786 = vunpack.c.l.b16 %v722
        %v787 = vunpack.c.l.b16 %v723
        %v788 = vunpack.c.l.b16 %v724
        %v789 = vunpack.c.l.b16 %v725
        %v790 = vunpack.c.l.b16 %v726
        %v791 = vunpack.c.l.b16 %v727
        %v792 = vunpack.c.l.b16 %v728
        %v793 = vunpack.c.l.b16 %v729
        %v794 = vunpack.c.l.b16 %v730
        %v795 = vunpack.c.l.b16 %v731
        %v796 = vunpack.c.l.b16 %v732
        %v797 = vunpack.c.l.b16 %v733
        %v798 = vunpack.c.l.b16 %v734
        %v799 = vunpack.c.l.b16 %v735
        %v800 = vunpack.c.l.b16 %v736
        %v801 = vpack.c.b16 %v770, %v769
        %v802 = vpack.c.b16 %v772, %v771
        %v803 = vpack.c.b16 %v774, %v773
        %v804 = vpack.c.b16 %v776, %v775
        %v805 = vpack.c.b16 %v778, %v777
        %v806 = vpack.c.b16 %v780, %v779
        %v807 = vpack.c.b16 %v782, %v781
        %v808 = vpack.c.b16 %v784, %v783
        %v809 = vpack.c.b16 %v786, %v785
        %v810 = vpack.c.b16 %v788, %v787
        %v811 = vpack.c.b16 %v790, %v789
        %v812 = vpack.c.b16 %v792, %v791
        %v813 = vpack.c.b16 %v794, %v793
        %v814 = vpack.c.b16 %v796, %v795
        %v815 = vpack.c.b16 %v798, %v797
        %v816 = vpack.c.b16 %v800, %v799
        %833 = vmatprep.subr.bf16.mxu0 0
        %834 = vmatpush1.bf16.msra.mxu0 %v801
        %835 = vmatprep.subr.bf16.mxu0 0
        %836 = vmatpush1.bf16.msra.mxu0 %v802
        %837 = vmatprep.subr.bf16.mxu0 0
        %838 = vmatpush1.bf16.msra.mxu0 %v803
        %839 = vmatprep.subr.bf16.mxu0 0
        %840 = vmatpush1.bf16.msra.mxu0 %v804
        %841 = vmatprep.subr.bf16.mxu0 0
        %842 = vmatpush1.bf16.msra.mxu0 %v805
        %843 = vmatprep.subr.bf16.mxu0 0
        %844 = vmatpush1.bf16.msra.mxu0 %v806
        %845 = vmatprep.subr.bf16.mxu0 0
        %846 = vmatpush1.bf16.msra.mxu0 %v807
        %847 = vmatprep.subr.bf16.mxu0 0
        %848 = vmatpush1.bf16.msra.mxu0 %v808
        %849 = vmatprep.subr.bf16.mxu0 0
        %850 = vmatpush1.bf16.msra.mxu0 %v809
        %851 = vmatprep.subr.bf16.mxu0 0
        %852 = vmatpush1.bf16.msra.mxu0 %v810
        %853 = vmatprep.subr.bf16.mxu0 0
        %854 = vmatpush1.bf16.msra.mxu0 %v811
        %855 = vmatprep.subr.bf16.mxu0 0
        %856 = vmatpush1.bf16.msra.mxu0 %v812
        %857 = vmatprep.subr.bf16.mxu0 0
        %858 = vmatpush1.bf16.msra.mxu0 %v813
        %859 = vmatprep.subr.bf16.mxu0 0
        %860 = vmatpush1.bf16.msra.mxu0 %v814
        %861 = vmatprep.subr.bf16.mxu0 0
        %862 = vmatpush1.bf16.msra.mxu0 %v815
        %863 = vmatprep.subr.bf16.mxu0 0
        %864 = vmatpush1.bf16.msra.mxu0 %v816
        %865 = vmatprep.mubr.bf16.mxu0 %v421
        %866 = vmatmul.mubr.bf16.gmra.mrb[0].mxu0 %v420
        %v867 = vpop.f32.mrb[0].mxu0
        %v868 = vadd.f32 0.0, %v867
        %v869 = vpop.f32.mrb[0].mxu0
        %v870 = vpop.f32.mrb[0].mxu0
        %v871 = vadd.f32 0.0, %v870
        %v872 = vpop.f32.mrb[0].mxu0
        %873 = vdwg.mxu0
        %v874 = vstv %s341
        %v875 = vmul.f32 %v874, %v868
        %v876 = vmul.f32 %v874, %v871
        %v877 = vadd.f32 %v695, %v875
        %v878 = vadd.f32 %v698, %v876
        %v879 = vld [vmem:[%s292 + $0x1] sm:$0x1]
        %v880 = vmul.f32 %v874, %v879
        %v881 = vadd.f32 %v703, %v880
        %s882 = scalar_lea.vmem %s283, 384 [#allocation7]
        %v883 = vld [vmem:[%s882] sm:$0xf]
        %v884 = vld [vmem:[%s882 + $0x4] sm:$0xf]
        %v885 = vld [vmem:[%s882 + $0x8] sm:$0xf]
        %v886 = vld [vmem:[%s882 + $0xc] sm:$0xf]
        %v887 = vld [vmem:[%s882 + $0x10] sm:$0xf]
        %v888 = vld [vmem:[%s882 + $0x14] sm:$0xf]
        %v889 = vld [vmem:[%s882 + $0x18] sm:$0xf]
        %v890 = vld [vmem:[%s882 + $0x1c] sm:$0xf]
        %v891 = vld [vmem:[%s882 + $0x20] sm:$0xf]
        %v892 = vld [vmem:[%s882 + $0x24] sm:$0xf]
        %v893 = vld [vmem:[%s882 + $0x28] sm:$0xf]
        %v894 = vld [vmem:[%s882 + $0x2c] sm:$0xf]
        %v895 = vld [vmem:[%s882 + $0x30] sm:$0xf]
        %v896 = vld [vmem:[%s882 + $0x34] sm:$0xf]
        %v897 = vld [vmem:[%s882 + $0x38] sm:$0xf]
        %v898 = vld [vmem:[%s882 + $0x3c] sm:$0xf]
        %v899 = vld [vmem:[%s882 + $0x40] sm:$0xf]
        %v900 = vld [vmem:[%s882 + $0x44] sm:$0xf]
        %v901 = vld [vmem:[%s882 + $0x48] sm:$0xf]
        %v902 = vld [vmem:[%s882 + $0x4c] sm:$0xf]
        %v903 = vld [vmem:[%s882 + $0x50] sm:$0xf]
        %v904 = vld [vmem:[%s882 + $0x54] sm:$0xf]
        %v905 = vld [vmem:[%s882 + $0x58] sm:$0xf]
        %v906 = vld [vmem:[%s882 + $0x5c] sm:$0xf]
        %v907 = vld [vmem:[%s882 + $0x60] sm:$0xf]
        %v908 = vld [vmem:[%s882 + $0x64] sm:$0xf]
        %v909 = vld [vmem:[%s882 + $0x68] sm:$0xf]
        %v910 = vld [vmem:[%s882 + $0x6c] sm:$0xf]
        %v911 = vld [vmem:[%s882 + $0x70] sm:$0xf]
        %v912 = vld [vmem:[%s882 + $0x74] sm:$0xf]
        %v913 = vld [vmem:[%s882 + $0x78] sm:$0xf]
        %v914 = vld [vmem:[%s882 + $0x7c] sm:$0xf]
        %v947 = vunpack.c.l.b16 %v883
        %v948 = vunpack.c.l.b16 %v884
        %v949 = vunpack.c.l.b16 %v885
        %v950 = vunpack.c.l.b16 %v886
        %v951 = vunpack.c.l.b16 %v887
        %v952 = vunpack.c.l.b16 %v888
        %v953 = vunpack.c.l.b16 %v889
        %v954 = vunpack.c.l.b16 %v890
        %v955 = vunpack.c.l.b16 %v891
        %v956 = vunpack.c.l.b16 %v892
        %v957 = vunpack.c.l.b16 %v893
        %v958 = vunpack.c.l.b16 %v894
        %v959 = vunpack.c.l.b16 %v895
        %v960 = vunpack.c.l.b16 %v896
        %v961 = vunpack.c.l.b16 %v897
        %v962 = vunpack.c.l.b16 %v898
        %v963 = vunpack.c.l.b16 %v899
        %v964 = vunpack.c.l.b16 %v900
        %v965 = vunpack.c.l.b16 %v901
        %v966 = vunpack.c.l.b16 %v902
        %v967 = vunpack.c.l.b16 %v903
        %v968 = vunpack.c.l.b16 %v904
        %v969 = vunpack.c.l.b16 %v905
        %v970 = vunpack.c.l.b16 %v906
        %v971 = vunpack.c.l.b16 %v907
        %v972 = vunpack.c.l.b16 %v908
        %v973 = vunpack.c.l.b16 %v909
        %v974 = vunpack.c.l.b16 %v910
        %v975 = vunpack.c.l.b16 %v911
        %v976 = vunpack.c.l.b16 %v912
        %v977 = vunpack.c.l.b16 %v913
        %v978 = vunpack.c.l.b16 %v914
        %v979 = vpack.c.b16 %v948, %v947
        %v980 = vpack.c.b16 %v950, %v949
        %v981 = vpack.c.b16 %v952, %v951
        %v982 = vpack.c.b16 %v954, %v953
        %v983 = vpack.c.b16 %v956, %v955
        %v984 = vpack.c.b16 %v958, %v957
        %v985 = vpack.c.b16 %v960, %v959
        %v986 = vpack.c.b16 %v962, %v961
        %v987 = vpack.c.b16 %v964, %v963
        %v988 = vpack.c.b16 %v966, %v965
        %v989 = vpack.c.b16 %v968, %v967
        %v990 = vpack.c.b16 %v970, %v969
        %v991 = vpack.c.b16 %v972, %v971
        %v992 = vpack.c.b16 %v974, %v973
        %v993 = vpack.c.b16 %v976, %v975
        %v994 = vpack.c.b16 %v978, %v977
        %1011 = vmatprep.subr.bf16.mxu0 0
        %1012 = vmatpush1.bf16.msra.mxu0 %v979
        %1013 = vmatprep.subr.bf16.mxu0 0
        %1014 = vmatpush1.bf16.msra.mxu0 %v980
        %1015 = vmatprep.subr.bf16.mxu0 0
        %1016 = vmatpush1.bf16.msra.mxu0 %v981
        %1017 = vmatprep.subr.bf16.mxu0 0
        %1018 = vmatpush1.bf16.msra.mxu0 %v982
        %1019 = vmatprep.subr.bf16.mxu0 0
        %1020 = vmatpush1.bf16.msra.mxu0 %v983
        %1021 = vmatprep.subr.bf16.mxu0 0
        %1022 = vmatpush1.bf16.msra.mxu0 %v984
        %1023 = vmatprep.subr.bf16.mxu0 0
        %1024 = vmatpush1.bf16.msra.mxu0 %v985
        %1025 = vmatprep.subr.bf16.mxu0 0
        %1026 = vmatpush1.bf16.msra.mxu0 %v986
        %1027 = vmatprep.subr.bf16.mxu0 0
        %1028 = vmatpush1.bf16.msra.mxu0 %v987
        %1029 = vmatprep.subr.bf16.mxu0 0
        %1030 = vmatpush1.bf16.msra.mxu0 %v988
        %1031 = vmatprep.subr.bf16.mxu0 0
        %1032 = vmatpush1.bf16.msra.mxu0 %v989
        %1033 = vmatprep.subr.bf16.mxu0 0
        %1034 = vmatpush1.bf16.msra.mxu0 %v990
        %1035 = vmatprep.subr.bf16.mxu0 0
        %1036 = vmatpush1.bf16.msra.mxu0 %v991
        %1037 = vmatprep.subr.bf16.mxu0 0
        %1038 = vmatpush1.bf16.msra.mxu0 %v992
        %1039 = vmatprep.subr.bf16.mxu0 0
        %1040 = vmatpush1.bf16.msra.mxu0 %v993
        %1041 = vmatprep.subr.bf16.mxu0 0
        %1042 = vmatpush1.bf16.msra.mxu0 %v994
        %1043 = vmatprep.mubr.bf16.mxu0 %v421
        %1044 = vmatmul.mubr.bf16.gmra.mrb[0].mxu0 %v420
        %v1045 = vpop.f32.mrb[0].mxu0
        %v1046 = vadd.f32 0.0, %v1045
        %v1047 = vpop.f32.mrb[0].mxu0
        %v1048 = vpop.f32.mrb[0].mxu0
        %v1049 = vadd.f32 0.0, %v1048
        %v1050 = vpop.f32.mrb[0].mxu0
        %1051 = vdwg.mxu0
        %v1052 = vstv %s342
        %v1053 = vmul.f32 %v1052, %v1046
        %v1054 = vmul.f32 %v1052, %v1049
        %v1055 = vadd.f32 %v877, %v1053
        %v1056 = vadd.f32 %v878, %v1054
        %v1057 = vld [vmem:[%s292 + $0x2] sm:$0x1]
        %v1058 = vmul.f32 %v1052, %v1057
        %v1059 = vadd.f32 %v881, %v1058
        %s1060 = scalar_lea.vmem %s283, 512 [#allocation7]
        %v1061 = vld [vmem:[%s1060] sm:$0xf]
        %v1062 = vld [vmem:[%s1060 + $0x4] sm:$0xf]
        %v1063 = vld [vmem:[%s1060 + $0x8] sm:$0xf]
        %v1064 = vld [vmem:[%s1060 + $0xc] sm:$0xf]
        %v1065 = vld [vmem:[%s1060 + $0x10] sm:$0xf]
        %v1066 = vld [vmem:[%s1060 + $0x14] sm:$0xf]
        %v1067 = vld [vmem:[%s1060 + $0x18] sm:$0xf]
        %v1068 = vld [vmem:[%s1060 + $0x1c] sm:$0xf]
        %v1069 = vld [vmem:[%s1060 + $0x20] sm:$0xf]
        %v1070 = vld [vmem:[%s1060 + $0x24] sm:$0xf]
        %v1071 = vld [vmem:[%s1060 + $0x28] sm:$0xf]
        %v1072 = vld [vmem:[%s1060 + $0x2c] sm:$0xf]
        %v1073 = vld [vmem:[%s1060 + $0x30] sm:$0xf]
        %v1074 = vld [vmem:[%s1060 + $0x34] sm:$0xf]
        %v1075 = vld [vmem:[%s1060 + $0x38] sm:$0xf]
        %v1076 = vld [vmem:[%s1060 + $0x3c] sm:$0xf]
        %v1077 = vld [vmem:[%s1060 + $0x40] sm:$0xf]
        %v1078 = vld [vmem:[%s1060 + $0x44] sm:$0xf]
        %v1079 = vld [vmem:[%s1060 + $0x48] sm:$0xf]
        %v1080 = vld [vmem:[%s1060 + $0x4c] sm:$0xf]
        %v1081 = vld [vmem:[%s1060 + $0x50] sm:$0xf]
        %v1082 = vld [vmem:[%s1060 + $0x54] sm:$0xf]
        %v1083 = vld [vmem:[%s1060 + $0x58] sm:$0xf]
        %v1084 = vld [vmem:[%s1060 + $0x5c] sm:$0xf]
        %v1085 = vld [vmem:[%s1060 + $0x60] sm:$0xf]
        %v1086 = vld [vmem:[%s1060 + $0x64] sm:$0xf]
        %v1087 = vld [vmem:[%s1060 + $0x68] sm:$0xf]
        %v1088 = vld [vmem:[%s1060 + $0x6c] sm:$0xf]
        %v1089 = vld [vmem:[%s1060 + $0x70] sm:$0xf]
        %v1090 = vld [vmem:[%s1060 + $0x74] sm:$0xf]
        %v1091 = vld [vmem:[%s1060 + $0x78] sm:$0xf]
        %v1092 = vld [vmem:[%s1060 + $0x7c] sm:$0xf]
        %v1125 = vunpack.c.l.b16 %v1061
        %v1126 = vunpack.c.l.b16 %v1062
        %v1127 = vunpack.c.l.b16 %v1063
        %v1128 = vunpack.c.l.b16 %v1064
        %v1129 = vunpack.c.l.b16 %v1065
        %v1130 = vunpack.c.l.b16 %v1066
        %v1131 = vunpack.c.l.b16 %v1067
        %v1132 = vunpack.c.l.b16 %v1068
        %v1133 = vunpack.c.l.b16 %v1069
        %v1134 = vunpack.c.l.b16 %v1070
        %v1135 = vunpack.c.l.b16 %v1071
        %v1136 = vunpack.c.l.b16 %v1072
        %v1137 = vunpack.c.l.b16 %v1073
        %v1138 = vunpack.c.l.b16 %v1074
        %v1139 = vunpack.c.l.b16 %v1075
        %v1140 = vunpack.c.l.b16 %v1076
        %v1141 = vunpack.c.l.b16 %v1077
        %v1142 = vunpack.c.l.b16 %v1078
        %v1143 = vunpack.c.l.b16 %v1079
        %v1144 = vunpack.c.l.b16 %v1080
        %v1145 = vunpack.c.l.b16 %v1081
        %v1146 = vunpack.c.l.b16 %v1082
        %v1147 = vunpack.c.l.b16 %v1083
        %v1148 = vunpack.c.l.b16 %v1084
        %v1149 = vunpack.c.l.b16 %v1085
        %v1150 = vunpack.c.l.b16 %v1086
        %v1151 = vunpack.c.l.b16 %v1087
        %v1152 = vunpack.c.l.b16 %v1088
        %v1153 = vunpack.c.l.b16 %v1089
        %v1154 = vunpack.c.l.b16 %v1090
        %v1155 = vunpack.c.l.b16 %v1091
        %v1156 = vunpack.c.l.b16 %v1092
        %v1157 = vpack.c.b16 %v1126, %v1125
        %v1158 = vpack.c.b16 %v1128, %v1127
        %v1159 = vpack.c.b16 %v1130, %v1129
        %v1160 = vpack.c.b16 %v1132, %v1131
        %v1161 = vpack.c.b16 %v1134, %v1133
        %v1162 = vpack.c.b16 %v1136, %v1135
        %v1163 = vpack.c.b16 %v1138, %v1137
        %v1164 = vpack.c.b16 %v1140, %v1139
        %v1165 = vpack.c.b16 %v1142, %v1141
        %v1166 = vpack.c.b16 %v1144, %v1143
        %v1167 = vpack.c.b16 %v1146, %v1145
        %v1168 = vpack.c.b16 %v1148, %v1147
        %v1169 = vpack.c.b16 %v1150, %v1149
        %v1170 = vpack.c.b16 %v1152, %v1151
        %v1171 = vpack.c.b16 %v1154, %v1153
        %v1172 = vpack.c.b16 %v1156, %v1155
        %1189 = vmatprep.subr.bf16.mxu0 0
        %1190 = vmatpush1.bf16.msra.mxu0 %v1157
        %1191 = vmatprep.subr.bf16.mxu0 0
        %1192 = vmatpush1.bf16.msra.mxu0 %v1158
        %1193 = vmatprep.subr.bf16.mxu0 0
        %1194 = vmatpush1.bf16.msra.mxu0 %v1159
        %1195 = vmatprep.subr.bf16.mxu0 0
        %1196 = vmatpush1.bf16.msra.mxu0 %v1160
        %1197 = vmatprep.subr.bf16.mxu0 0
        %1198 = vmatpush1.bf16.msra.mxu0 %v1161
        %1199 = vmatprep.subr.bf16.mxu0 0
        %1200 = vmatpush1.bf16.msra.mxu0 %v1162
        %1201 = vmatprep.subr.bf16.mxu0 0
        %1202 = vmatpush1.bf16.msra.mxu0 %v1163
        %1203 = vmatprep.subr.bf16.mxu0 0
        %1204 = vmatpush1.bf16.msra.mxu0 %v1164
        %1205 = vmatprep.subr.bf16.mxu0 0
        %1206 = vmatpush1.bf16.msra.mxu0 %v1165
        %1207 = vmatprep.subr.bf16.mxu0 0
        %1208 = vmatpush1.bf16.msra.mxu0 %v1166
        %1209 = vmatprep.subr.bf16.mxu0 0
        %1210 = vmatpush1.bf16.msra.mxu0 %v1167
        %1211 = vmatprep.subr.bf16.mxu0 0
        %1212 = vmatpush1.bf16.msra.mxu0 %v1168
        %1213 = vmatprep.subr.bf16.mxu0 0
        %1214 = vmatpush1.bf16.msra.mxu0 %v1169
        %1215 = vmatprep.subr.bf16.mxu0 0
        %1216 = vmatpush1.bf16.msra.mxu0 %v1170
        %1217 = vmatprep.subr.bf16.mxu0 0
        %1218 = vmatpush1.bf16.msra.mxu0 %v1171
        %1219 = vmatprep.subr.bf16.mxu0 0
        %1220 = vmatpush1.bf16.msra.mxu0 %v1172
        %1221 = vmatprep.mubr.bf16.mxu0 %v421
        %1222 = vmatmul.mubr.bf16.gmra.mrb[0].mxu0 %v420
        %v1223 = vpop.f32.mrb[0].mxu0
        %v1224 = vadd.f32 0.0, %v1223
        %v1225 = vpop.f32.mrb[0].mxu0
        %v1226 = vpop.f32.mrb[0].mxu0
        %v1227 = vadd.f32 0.0, %v1226
        %v1228 = vpop.f32.mrb[0].mxu0
        %1229 = vdwg.mxu0
        %v1230 = vstv %s343
        %v1231 = vmul.f32 %v1230, %v1224
        %v1232 = vmul.f32 %v1230, %v1227
        %v1233 = vadd.f32 %v1055, %v1231
        %v1234 = vadd.f32 %v1056, %v1232
        %v1235 = vld [vmem:[%s292 + $0x3] sm:$0x1]
        %v1236 = vmul.f32 %v1230, %v1235
        %v1237 = vadd.f32 %v1059, %v1236
        %s1238 = scalar_lea.vmem %s283, 640 [#allocation7]
        %v1239 = vld [vmem:[%s1238] sm:$0xf]
        %v1240 = vld [vmem:[%s1238 + $0x4] sm:$0xf]
        %v1241 = vld [vmem:[%s1238 + $0x8] sm:$0xf]
        %v1242 = vld [vmem:[%s1238 + $0xc] sm:$0xf]
        %v1243 = vld [vmem:[%s1238 + $0x10] sm:$0xf]
        %v1244 = vld [vmem:[%s1238 + $0x14] sm:$0xf]
        %v1245 = vld [vmem:[%s1238 + $0x18] sm:$0xf]
        %v1246 = vld [vmem:[%s1238 + $0x1c] sm:$0xf]
        %v1247 = vld [vmem:[%s1238 + $0x20] sm:$0xf]
        %v1248 = vld [vmem:[%s1238 + $0x24] sm:$0xf]
        %v1249 = vld [vmem:[%s1238 + $0x28] sm:$0xf]
        %v1250 = vld [vmem:[%s1238 + $0x2c] sm:$0xf]
        %v1251 = vld [vmem:[%s1238 + $0x30] sm:$0xf]
        %v1252 = vld [vmem:[%s1238 + $0x34] sm:$0xf]
        %v1253 = vld [vmem:[%s1238 + $0x38] sm:$0xf]
        %v1254 = vld [vmem:[%s1238 + $0x3c] sm:$0xf]
        %v1255 = vld [vmem:[%s1238 + $0x40] sm:$0xf]
        %v1256 = vld [vmem:[%s1238 + $0x44] sm:$0xf]
        %v1257 = vld [vmem:[%s1238 + $0x48] sm:$0xf]
        %v1258 = vld [vmem:[%s1238 + $0x4c] sm:$0xf]
        %v1259 = vld [vmem:[%s1238 + $0x50] sm:$0xf]
        %v1260 = vld [vmem:[%s1238 + $0x54] sm:$0xf]
        %v1261 = vld [vmem:[%s1238 + $0x58] sm:$0xf]
        %v1262 = vld [vmem:[%s1238 + $0x5c] sm:$0xf]
        %v1263 = vld [vmem:[%s1238 + $0x60] sm:$0xf]
        %v1264 = vld [vmem:[%s1238 + $0x64] sm:$0xf]
        %v1265 = vld [vmem:[%s1238 + $0x68] sm:$0xf]
        %v1266 = vld [vmem:[%s1238 + $0x6c] sm:$0xf]
        %v1267 = vld [vmem:[%s1238 + $0x70] sm:$0xf]
        %v1268 = vld [vmem:[%s1238 + $0x74] sm:$0xf]
        %v1269 = vld [vmem:[%s1238 + $0x78] sm:$0xf]
        %v1270 = vld [vmem:[%s1238 + $0x7c] sm:$0xf]
        %v1303 = vunpack.c.l.b16 %v1239
        %v1304 = vunpack.c.l.b16 %v1240
        %v1305 = vunpack.c.l.b16 %v1241
        %v1306 = vunpack.c.l.b16 %v1242
        %v1307 = vunpack.c.l.b16 %v1243
        %v1308 = vunpack.c.l.b16 %v1244
        %v1309 = vunpack.c.l.b16 %v1245
        %v1310 = vunpack.c.l.b16 %v1246
        %v1311 = vunpack.c.l.b16 %v1247
        %v1312 = vunpack.c.l.b16 %v1248
        %v1313 = vunpack.c.l.b16 %v1249
        %v1314 = vunpack.c.l.b16 %v1250
        %v1315 = vunpack.c.l.b16 %v1251
        %v1316 = vunpack.c.l.b16 %v1252
        %v1317 = vunpack.c.l.b16 %v1253
        %v1318 = vunpack.c.l.b16 %v1254
        %v1319 = vunpack.c.l.b16 %v1255
        %v1320 = vunpack.c.l.b16 %v1256
        %v1321 = vunpack.c.l.b16 %v1257
        %v1322 = vunpack.c.l.b16 %v1258
        %v1323 = vunpack.c.l.b16 %v1259
        %v1324 = vunpack.c.l.b16 %v1260
        %v1325 = vunpack.c.l.b16 %v1261
        %v1326 = vunpack.c.l.b16 %v1262
        %v1327 = vunpack.c.l.b16 %v1263
        %v1328 = vunpack.c.l.b16 %v1264
        %v1329 = vunpack.c.l.b16 %v1265
        %v1330 = vunpack.c.l.b16 %v1266
        %v1331 = vunpack.c.l.b16 %v1267
        %v1332 = vunpack.c.l.b16 %v1268
        %v1333 = vunpack.c.l.b16 %v1269
        %v1334 = vunpack.c.l.b16 %v1270
        %v1335 = vpack.c.b16 %v1304, %v1303
        %v1336 = vpack.c.b16 %v1306, %v1305
        %v1337 = vpack.c.b16 %v1308, %v1307
        %v1338 = vpack.c.b16 %v1310, %v1309
        %v1339 = vpack.c.b16 %v1312, %v1311
        %v1340 = vpack.c.b16 %v1314, %v1313
        %v1341 = vpack.c.b16 %v1316, %v1315
        %v1342 = vpack.c.b16 %v1318, %v1317
        %v1343 = vpack.c.b16 %v1320, %v1319
        %v1344 = vpack.c.b16 %v1322, %v1321
        %v1345 = vpack.c.b16 %v1324, %v1323
        %v1346 = vpack.c.b16 %v1326, %v1325
        %v1347 = vpack.c.b16 %v1328, %v1327
        %v1348 = vpack.c.b16 %v1330, %v1329
        %v1349 = vpack.c.b16 %v1332, %v1331
        %v1350 = vpack.c.b16 %v1334, %v1333
        %1367 = vmatprep.subr.bf16.mxu0 0
        %1368 = vmatpush1.bf16.msra.mxu0 %v1335
        %1369 = vmatprep.subr.bf16.mxu0 0
        %1370 = vmatpush1.bf16.msra.mxu0 %v1336
        %1371 = vmatprep.subr.bf16.mxu0 0
        %1372 = vmatpush1.bf16.msra.mxu0 %v1337
        %1373 = vmatprep.subr.bf16.mxu0 0
        %1374 = vmatpush1.bf16.msra.mxu0 %v1338
        %1375 = vmatprep.subr.bf16.mxu0 0
        %1376 = vmatpush1.bf16.msra.mxu0 %v1339
        %1377 = vmatprep.subr.bf16.mxu0 0
        %1378 = vmatpush1.bf16.msra.mxu0 %v1340
        %1379 = vmatprep.subr.bf16.mxu0 0
        %1380 = vmatpush1.bf16.msra.mxu0 %v1341
        %1381 = vmatprep.subr.bf16.mxu0 0
        %1382 = vmatpush1.bf16.msra.mxu0 %v1342
        %1383 = vmatprep.subr.bf16.mxu0 0
        %1384 = vmatpush1.bf16.msra.mxu0 %v1343
        %1385 = vmatprep.subr.bf16.mxu0 0
        %1386 = vmatpush1.bf16.msra.mxu0 %v1344
        %1387 = vmatprep.subr.bf16.mxu0 0
        %1388 = vmatpush1.bf16.msra.mxu0 %v1345
        %1389 = vmatprep.subr.bf16.mxu0 0
        %1390 = vmatpush1.bf16.msra.mxu0 %v1346
        %1391 = vmatprep.subr.bf16.mxu0 0
        %1392 = vmatpush1.bf16.msra.mxu0 %v1347
        %1393 = vmatprep.subr.bf16.mxu0 0
        %1394 = vmatpush1.bf16.msra.mxu0 %v1348
        %1395 = vmatprep.subr.bf16.mxu0 0
        %1396 = vmatpush1.bf16.msra.mxu0 %v1349
        %1397 = vmatprep.subr.bf16.mxu0 0
        %1398 = vmatpush1.bf16.msra.mxu0 %v1350
        %1399 = vmatprep.mubr.bf16.mxu0 %v421
        %1400 = vmatmul.mubr.bf16.gmra.mrb[0].mxu0 %v420
        %v1401 = vpop.f32.mrb[0].mxu0
        %v1402 = vadd.f32 0.0, %v1401
        %v1403 = vpop.f32.mrb[0].mxu0
        %v1404 = vpop.f32.mrb[0].mxu0
        %v1405 = vadd.f32 0.0, %v1404
        %v1406 = vpop.f32.mrb[0].mxu0
        %1407 = vdwg.mxu0
        %v1408 = vstv %s344
        %v1409 = vmul.f32 %v1408, %v1402
        %v1410 = vmul.f32 %v1408, %v1405
        %v1411 = vadd.f32 %v1233, %v1409
        %v1412 = vadd.f32 %v1234, %v1410
        %v1413 = vld [vmem:[%s292 + $0x4] sm:$0x1]
        %v1414 = vmul.f32 %v1408, %v1413
        %v1415 = vadd.f32 %v1237, %v1414
        %s1416 = scalar_lea.vmem %s283, 768 [#allocation7]
        %v1417 = vld [vmem:[%s1416] sm:$0xf]
        %v1418 = vld [vmem:[%s1416 + $0x4] sm:$0xf]
        %v1419 = vld [vmem:[%s1416 + $0x8] sm:$0xf]
        %v1420 = vld [vmem:[%s1416 + $0xc] sm:$0xf]
        %v1421 = vld [vmem:[%s1416 + $0x10] sm:$0xf]
        %v1422 = vld [vmem:[%s1416 + $0x14] sm:$0xf]
        %v1423 = vld [vmem:[%s1416 + $0x18] sm:$0xf]
        %v1424 = vld [vmem:[%s1416 + $0x1c] sm:$0xf]
        %v1425 = vld [vmem:[%s1416 + $0x20] sm:$0xf]
        %v1426 = vld [vmem:[%s1416 + $0x24] sm:$0xf]
        %v1427 = vld [vmem:[%s1416 + $0x28] sm:$0xf]
        %v1428 = vld [vmem:[%s1416 + $0x2c] sm:$0xf]
        %v1429 = vld [vmem:[%s1416 + $0x30] sm:$0xf]
        %v1430 = vld [vmem:[%s1416 + $0x34] sm:$0xf]
        %v1431 = vld [vmem:[%s1416 + $0x38] sm:$0xf]
        %v1432 = vld [vmem:[%s1416 + $0x3c] sm:$0xf]
        %v1433 = vld [vmem:[%s1416 + $0x40] sm:$0xf]
        %v1434 = vld [vmem:[%s1416 + $0x44] sm:$0xf]
        %v1435 = vld [vmem:[%s1416 + $0x48] sm:$0xf]
        %v1436 = vld [vmem:[%s1416 + $0x4c] sm:$0xf]
        %v1437 = vld [vmem:[%s1416 + $0x50] sm:$0xf]
        %v1438 = vld [vmem:[%s1416 + $0x54] sm:$0xf]
        %v1439 = vld [vmem:[%s1416 + $0x58] sm:$0xf]
        %v1440 = vld [vmem:[%s1416 + $0x5c] sm:$0xf]
        %v1441 = vld [vmem:[%s1416 + $0x60] sm:$0xf]
        %v1442 = vld [vmem:[%s1416 + $0x64] sm:$0xf]
        %v1443 = vld [vmem:[%s1416 + $0x68] sm:$0xf]
        %v1444 = vld [vmem:[%s1416 + $0x6c] sm:$0xf]
        %v1445 = vld [vmem:[%s1416 + $0x70] sm:$0xf]
        %v1446 = vld [vmem:[%s1416 + $0x74] sm:$0xf]
        %v1447 = vld [vmem:[%s1416 + $0x78] sm:$0xf]
        %v1448 = vld [vmem:[%s1416 + $0x7c] sm:$0xf]
        %v1481 = vunpack.c.l.b16 %v1417
        %v1482 = vunpack.c.l.b16 %v1418
        %v1483 = vunpack.c.l.b16 %v1419
        %v1484 = vunpack.c.l.b16 %v1420
        %v1485 = vunpack.c.l.b16 %v1421
        %v1486 = vunpack.c.l.b16 %v1422
        %v1487 = vunpack.c.l.b16 %v1423
        %v1488 = vunpack.c.l.b16 %v1424
        %v1489 = vunpack.c.l.b16 %v1425
        %v1490 = vunpack.c.l.b16 %v1426
        %v1491 = vunpack.c.l.b16 %v1427
        %v1492 = vunpack.c.l.b16 %v1428
        %v1493 = vunpack.c.l.b16 %v1429
        %v1494 = vunpack.c.l.b16 %v1430
        %v1495 = vunpack.c.l.b16 %v1431
        %v1496 = vunpack.c.l.b16 %v1432
        %v1497 = vunpack.c.l.b16 %v1433
        %v1498 = vunpack.c.l.b16 %v1434
        %v1499 = vunpack.c.l.b16 %v1435
        %v1500 = vunpack.c.l.b16 %v1436
        %v1501 = vunpack.c.l.b16 %v1437
        %v1502 = vunpack.c.l.b16 %v1438
        %v1503 = vunpack.c.l.b16 %v1439
        %v1504 = vunpack.c.l.b16 %v1440
        %v1505 = vunpack.c.l.b16 %v1441
        %v1506 = vunpack.c.l.b16 %v1442
        %v1507 = vunpack.c.l.b16 %v1443
        %v1508 = vunpack.c.l.b16 %v1444
        %v1509 = vunpack.c.l.b16 %v1445
        %v1510 = vunpack.c.l.b16 %v1446
        %v1511 = vunpack.c.l.b16 %v1447
        %v1512 = vunpack.c.l.b16 %v1448
        %v1513 = vpack.c.b16 %v1482, %v1481
        %v1514 = vpack.c.b16 %v1484, %v1483
        %v1515 = vpack.c.b16 %v1486, %v1485
        %v1516 = vpack.c.b16 %v1488, %v1487
        %v1517 = vpack.c.b16 %v1490, %v1489
        %v1518 = vpack.c.b16 %v1492, %v1491
        %v1519 = vpack.c.b16 %v1494, %v1493
        %v1520 = vpack.c.b16 %v1496, %v1495
        %v1521 = vpack.c.b16 %v1498, %v1497
        %v1522 = vpack.c.b16 %v1500, %v1499
        %v1523 = vpack.c.b16 %v1502, %v1501
        %v1524 = vpack.c.b16 %v1504, %v1503
        %v1525 = vpack.c.b16 %v1506, %v1505
        %v1526 = vpack.c.b16 %v1508, %v1507
        %v1527 = vpack.c.b16 %v1510, %v1509
        %v1528 = vpack.c.b16 %v1512, %v1511
        %1545 = vmatprep.subr.bf16.mxu0 0
        %1546 = vmatpush1.bf16.msra.mxu0 %v1513
        %1547 = vmatprep.subr.bf16.mxu0 0
        %1548 = vmatpush1.bf16.msra.mxu0 %v1514
        %1549 = vmatprep.subr.bf16.mxu0 0
        %1550 = vmatpush1.bf16.msra.mxu0 %v1515
        %1551 = vmatprep.subr.bf16.mxu0 0
        %1552 = vmatpush1.bf16.msra.mxu0 %v1516
        %1553 = vmatprep.subr.bf16.mxu0 0
        %1554 = vmatpush1.bf16.msra.mxu0 %v1517
        %1555 = vmatprep.subr.bf16.mxu0 0
        %1556 = vmatpush1.bf16.msra.mxu0 %v1518
        %1557 = vmatprep.subr.bf16.mxu0 0
        %1558 = vmatpush1.bf16.msra.mxu0 %v1519
        %1559 = vmatprep.subr.bf16.mxu0 0
        %1560 = vmatpush1.bf16.msra.mxu0 %v1520
        %1561 = vmatprep.subr.bf16.mxu0 0
        %1562 = vmatpush1.bf16.msra.mxu0 %v1521
        %1563 = vmatprep.subr.bf16.mxu0 0
        %1564 = vmatpush1.bf16.msra.mxu0 %v1522
        %1565 = vmatprep.subr.bf16.mxu0 0
        %1566 = vmatpush1.bf16.msra.mxu0 %v1523
        %1567 = vmatprep.subr.bf16.mxu0 0
        %1568 = vmatpush1.bf16.msra.mxu0 %v1524
        %1569 = vmatprep.subr.bf16.mxu0 0
        %1570 = vmatpush1.bf16.msra.mxu0 %v1525
        %1571 = vmatprep.subr.bf16.mxu0 0
        %1572 = vmatpush1.bf16.msra.mxu0 %v1526
        %1573 = vmatprep.subr.bf16.mxu0 0
        %1574 = vmatpush1.bf16.msra.mxu0 %v1527
        %1575 = vmatprep.subr.bf16.mxu0 0
        %1576 = vmatpush1.bf16.msra.mxu0 %v1528
        %1577 = vmatprep.mubr.bf16.mxu0 %v421
        %1578 = vmatmul.mubr.bf16.gmra.mrb[0].mxu0 %v420
        %v1579 = vpop.f32.mrb[0].mxu0
        %v1580 = vadd.f32 0.0, %v1579
        %v1581 = vpop.f32.mrb[0].mxu0
        %v1582 = vpop.f32.mrb[0].mxu0
        %v1583 = vadd.f32 0.0, %v1582
        %v1584 = vpop.f32.mrb[0].mxu0
        %1585 = vdwg.mxu0
        %v1586 = vstv %s345
        %v1587 = vmul.f32 %v1586, %v1580
        %v1588 = vmul.f32 %v1586, %v1583
        %v1589 = vadd.f32 %v1411, %v1587
        %v1590 = vadd.f32 %v1412, %v1588
        %v1591 = vld [vmem:[%s292 + $0x5] sm:$0x1]
        %v1592 = vmul.f32 %v1586, %v1591
        %v1593 = vadd.f32 %v1415, %v1592
        %s1594 = scalar_lea.vmem %s283, 896 [#allocation7]
        %v1595 = vld [vmem:[%s1594] sm:$0xf]
        %v1596 = vld [vmem:[%s1594 + $0x4] sm:$0xf]
        %v1597 = vld [vmem:[%s1594 + $0x8] sm:$0xf]
        %v1598 = vld [vmem:[%s1594 + $0xc] sm:$0xf]
        %v1599 = vld [vmem:[%s1594 + $0x10] sm:$0xf]
        %v1600 = vld [vmem:[%s1594 + $0x14] sm:$0xf]
        %v1601 = vld [vmem:[%s1594 + $0x18] sm:$0xf]
        %v1602 = vld [vmem:[%s1594 + $0x1c] sm:$0xf]
        %v1603 = vld [vmem:[%s1594 + $0x20] sm:$0xf]
        %v1604 = vld [vmem:[%s1594 + $0x24] sm:$0xf]
        %v1605 = vld [vmem:[%s1594 + $0x28] sm:$0xf]
        %v1606 = vld [vmem:[%s1594 + $0x2c] sm:$0xf]
        %v1607 = vld [vmem:[%s1594 + $0x30] sm:$0xf]
        %v1608 = vld [vmem:[%s1594 + $0x34] sm:$0xf]
        %v1609 = vld [vmem:[%s1594 + $0x38] sm:$0xf]
        %v1610 = vld [vmem:[%s1594 + $0x3c] sm:$0xf]
        %v1611 = vld [vmem:[%s1594 + $0x40] sm:$0xf]
        %v1612 = vld [vmem:[%s1594 + $0x44] sm:$0xf]
        %v1613 = vld [vmem:[%s1594 + $0x48] sm:$0xf]
        %v1614 = vld [vmem:[%s1594 + $0x4c] sm:$0xf]
        %v1615 = vld [vmem:[%s1594 + $0x50] sm:$0xf]
        %v1616 = vld [vmem:[%s1594 + $0x54] sm:$0xf]
        %v1617 = vld [vmem:[%s1594 + $0x58] sm:$0xf]
        %v1618 = vld [vmem:[%s1594 + $0x5c] sm:$0xf]
        %v1619 = vld [vmem:[%s1594 + $0x60] sm:$0xf]
        %v1620 = vld [vmem:[%s1594 + $0x64] sm:$0xf]
        %v1621 = vld [vmem:[%s1594 + $0x68] sm:$0xf]
        %v1622 = vld [vmem:[%s1594 + $0x6c] sm:$0xf]
        %v1623 = vld [vmem:[%s1594 + $0x70] sm:$0xf]
        %v1624 = vld [vmem:[%s1594 + $0x74] sm:$0xf]
        %v1625 = vld [vmem:[%s1594 + $0x78] sm:$0xf]
        %v1626 = vld [vmem:[%s1594 + $0x7c] sm:$0xf]
        %v1659 = vunpack.c.l.b16 %v1595
        %v1660 = vunpack.c.l.b16 %v1596
        %v1661 = vunpack.c.l.b16 %v1597
        %v1662 = vunpack.c.l.b16 %v1598
        %v1663 = vunpack.c.l.b16 %v1599
        %v1664 = vunpack.c.l.b16 %v1600
        %v1665 = vunpack.c.l.b16 %v1601
        %v1666 = vunpack.c.l.b16 %v1602
        %v1667 = vunpack.c.l.b16 %v1603
        %v1668 = vunpack.c.l.b16 %v1604
        %v1669 = vunpack.c.l.b16 %v1605
        %v1670 = vunpack.c.l.b16 %v1606
        %v1671 = vunpack.c.l.b16 %v1607
        %v1672 = vunpack.c.l.b16 %v1608
        %v1673 = vunpack.c.l.b16 %v1609
        %v1674 = vunpack.c.l.b16 %v1610
        %v1675 = vunpack.c.l.b16 %v1611
        %v1676 = vunpack.c.l.b16 %v1612
        %v1677 = vunpack.c.l.b16 %v1613
        %v1678 = vunpack.c.l.b16 %v1614
        %v1679 = vunpack.c.l.b16 %v1615
        %v1680 = vunpack.c.l.b16 %v1616
        %v1681 = vunpack.c.l.b16 %v1617
        %v1682 = vunpack.c.l.b16 %v1618
        %v1683 = vunpack.c.l.b16 %v1619
        %v1684 = vunpack.c.l.b16 %v1620
        %v1685 = vunpack.c.l.b16 %v1621
        %v1686 = vunpack.c.l.b16 %v1622
        %v1687 = vunpack.c.l.b16 %v1623
        %v1688 = vunpack.c.l.b16 %v1624
        %v1689 = vunpack.c.l.b16 %v1625
        %v1690 = vunpack.c.l.b16 %v1626
        %v1691 = vpack.c.b16 %v1660, %v1659
        %v1692 = vpack.c.b16 %v1662, %v1661
        %v1693 = vpack.c.b16 %v1664, %v1663
        %v1694 = vpack.c.b16 %v1666, %v1665
        %v1695 = vpack.c.b16 %v1668, %v1667
        %v1696 = vpack.c.b16 %v1670, %v1669
        %v1697 = vpack.c.b16 %v1672, %v1671
        %v1698 = vpack.c.b16 %v1674, %v1673
        %v1699 = vpack.c.b16 %v1676, %v1675
        %v1700 = vpack.c.b16 %v1678, %v1677
        %v1701 = vpack.c.b16 %v1680, %v1679
        %v1702 = vpack.c.b16 %v1682, %v1681
        %v1703 = vpack.c.b16 %v1684, %v1683
        %v1704 = vpack.c.b16 %v1686, %v1685
        %v1705 = vpack.c.b16 %v1688, %v1687
        %v1706 = vpack.c.b16 %v1690, %v1689
        %1723 = vmatprep.subr.bf16.mxu0 0
        %1724 = vmatpush1.bf16.msra.mxu0 %v1691
        %1725 = vmatprep.subr.bf16.mxu0 0
        %1726 = vmatpush1.bf16.msra.mxu0 %v1692
        %1727 = vmatprep.subr.bf16.mxu0 0
        %1728 = vmatpush1.bf16.msra.mxu0 %v1693
        %1729 = vmatprep.subr.bf16.mxu0 0
        %1730 = vmatpush1.bf16.msra.mxu0 %v1694
        %1731 = vmatprep.subr.bf16.mxu0 0
        %1732 = vmatpush1.bf16.msra.mxu0 %v1695
        %1733 = vmatprep.subr.bf16.mxu0 0
        %1734 = vmatpush1.bf16.msra.mxu0 %v1696
        %1735 = vmatprep.subr.bf16.mxu0 0
        %1736 = vmatpush1.bf16.msra.mxu0 %v1697
        %1737 = vmatprep.subr.bf16.mxu0 0
        %1738 = vmatpush1.bf16.msra.mxu0 %v1698
        %1739 = vmatprep.subr.bf16.mxu0 0
        %1740 = vmatpush1.bf16.msra.mxu0 %v1699
        %1741 = vmatprep.subr.bf16.mxu0 0
        %1742 = vmatpush1.bf16.msra.mxu0 %v1700
        %1743 = vmatprep.subr.bf16.mxu0 0
        %1744 = vmatpush1.bf16.msra.mxu0 %v1701
        %1745 = vmatprep.subr.bf16.mxu0 0
        %1746 = vmatpush1.bf16.msra.mxu0 %v1702
        %1747 = vmatprep.subr.bf16.mxu0 0
        %1748 = vmatpush1.bf16.msra.mxu0 %v1703
        %1749 = vmatprep.subr.bf16.mxu0 0
        %1750 = vmatpush1.bf16.msra.mxu0 %v1704
        %1751 = vmatprep.subr.bf16.mxu0 0
        %1752 = vmatpush1.bf16.msra.mxu0 %v1705
        %1753 = vmatprep.subr.bf16.mxu0 0
        %1754 = vmatpush1.bf16.msra.mxu0 %v1706
        %1755 = vmatprep.mubr.bf16.mxu0 %v421
        %1756 = vmatmul.mubr.bf16.gmra.mrb[0].mxu0 %v420
        %v1757 = vpop.f32.mrb[0].mxu0
        %v1758 = vadd.f32 0.0, %v1757
        %v1759 = vpop.f32.mrb[0].mxu0
        %v1760 = vpop.f32.mrb[0].mxu0
        %v1761 = vadd.f32 0.0, %v1760
        %v1762 = vpop.f32.mrb[0].mxu0
        %1763 = vdwg.mxu0
        %v1764 = vstv %s346
        %v1765 = vmul.f32 %v1764, %v1758
        %v1766 = vmul.f32 %v1764, %v1761
        %v1767 = vadd.f32 %v1589, %v1765
        %v1768 = vadd.f32 %v1590, %v1766
        %v1769 = vld [vmem:[%s292 + $0x6] sm:$0x1]
        %v1770 = vmul.f32 %v1764, %v1769
        %v1771 = vadd.f32 %v1593, %v1770
        %s1772 = scalar_lea.vmem %s283, 1024 [#allocation7]
        %v1773 = vld [vmem:[%s1772] sm:$0xf]
        %v1774 = vld [vmem:[%s1772 + $0x4] sm:$0xf]
        %v1775 = vld [vmem:[%s1772 + $0x8] sm:$0xf]
        %v1776 = vld [vmem:[%s1772 + $0xc] sm:$0xf]
        %v1777 = vld [vmem:[%s1772 + $0x10] sm:$0xf]
        %v1778 = vld [vmem:[%s1772 + $0x14] sm:$0xf]
        %v1779 = vld [vmem:[%s1772 + $0x18] sm:$0xf]
        %v1780 = vld [vmem:[%s1772 + $0x1c] sm:$0xf]
        %v1781 = vld [vmem:[%s1772 + $0x20] sm:$0xf]
        %v1782 = vld [vmem:[%s1772 + $0x24] sm:$0xf]
        %v1783 = vld [vmem:[%s1772 + $0x28] sm:$0xf]
        %v1784 = vld [vmem:[%s1772 + $0x2c] sm:$0xf]
        %v1785 = vld [vmem:[%s1772 + $0x30] sm:$0xf]
        %v1786 = vld [vmem:[%s1772 + $0x34] sm:$0xf]
        %v1787 = vld [vmem:[%s1772 + $0x38] sm:$0xf]
        %v1788 = vld [vmem:[%s1772 + $0x3c] sm:$0xf]
        %v1789 = vld [vmem:[%s1772 + $0x40] sm:$0xf]
        %v1790 = vld [vmem:[%s1772 + $0x44] sm:$0xf]
        %v1791 = vld [vmem:[%s1772 + $0x48] sm:$0xf]
        %v1792 = vld [vmem:[%s1772 + $0x4c] sm:$0xf]
        %v1793 = vld [vmem:[%s1772 + $0x50] sm:$0xf]
        %v1794 = vld [vmem:[%s1772 + $0x54] sm:$0xf]
        %v1795 = vld [vmem:[%s1772 + $0x58] sm:$0xf]
        %v1796 = vld [vmem:[%s1772 + $0x5c] sm:$0xf]
        %v1797 = vld [vmem:[%s1772 + $0x60] sm:$0xf]
        %v1798 = vld [vmem:[%s1772 + $0x64] sm:$0xf]
        %v1799 = vld [vmem:[%s1772 + $0x68] sm:$0xf]
        %v1800 = vld [vmem:[%s1772 + $0x6c] sm:$0xf]
        %v1801 = vld [vmem:[%s1772 + $0x70] sm:$0xf]
        %v1802 = vld [vmem:[%s1772 + $0x74] sm:$0xf]
        %v1803 = vld [vmem:[%s1772 + $0x78] sm:$0xf]
        %v1804 = vld [vmem:[%s1772 + $0x7c] sm:$0xf]
        %v1837 = vunpack.c.l.b16 %v1773
        %v1838 = vunpack.c.l.b16 %v1774
        %v1839 = vunpack.c.l.b16 %v1775
        %v1840 = vunpack.c.l.b16 %v1776
        %v1841 = vunpack.c.l.b16 %v1777
        %v1842 = vunpack.c.l.b16 %v1778
        %v1843 = vunpack.c.l.b16 %v1779
        %v1844 = vunpack.c.l.b16 %v1780
        %v1845 = vunpack.c.l.b16 %v1781
        %v1846 = vunpack.c.l.b16 %v1782
        %v1847 = vunpack.c.l.b16 %v1783
        %v1848 = vunpack.c.l.b16 %v1784
        %v1849 = vunpack.c.l.b16 %v1785
        %v1850 = vunpack.c.l.b16 %v1786
        %v1851 = vunpack.c.l.b16 %v1787
        %v1852 = vunpack.c.l.b16 %v1788
        %v1853 = vunpack.c.l.b16 %v1789
        %v1854 = vunpack.c.l.b16 %v1790
        %v1855 = vunpack.c.l.b16 %v1791
        %v1856 = vunpack.c.l.b16 %v1792
        %v1857 = vunpack.c.l.b16 %v1793
        %v1858 = vunpack.c.l.b16 %v1794
        %v1859 = vunpack.c.l.b16 %v1795
        %v1860 = vunpack.c.l.b16 %v1796
        %v1861 = vunpack.c.l.b16 %v1797
        %v1862 = vunpack.c.l.b16 %v1798
        %v1863 = vunpack.c.l.b16 %v1799
        %v1864 = vunpack.c.l.b16 %v1800
        %v1865 = vunpack.c.l.b16 %v1801
        %v1866 = vunpack.c.l.b16 %v1802
        %v1867 = vunpack.c.l.b16 %v1803
        %v1868 = vunpack.c.l.b16 %v1804
        %v1869 = vpack.c.b16 %v1838, %v1837
        %v1870 = vpack.c.b16 %v1840, %v1839
        %v1871 = vpack.c.b16 %v1842, %v1841
        %v1872 = vpack.c.b16 %v1844, %v1843
        %v1873 = vpack.c.b16 %v1846, %v1845
        %v1874 = vpack.c.b16 %v1848, %v1847
        %v1875 = vpack.c.b16 %v1850, %v1849
        %v1876 = vpack.c.b16 %v1852, %v1851
        %v1877 = vpack.c.b16 %v1854, %v1853
        %v1878 = vpack.c.b16 %v1856, %v1855
        %v1879 = vpack.c.b16 %v1858, %v1857
        %v1880 = vpack.c.b16 %v1860, %v1859
        %v1881 = vpack.c.b16 %v1862, %v1861
        %v1882 = vpack.c.b16 %v1864, %v1863
        %v1883 = vpack.c.b16 %v1866, %v1865
        %v1884 = vpack.c.b16 %v1868, %v1867
        %1901 = vmatprep.subr.bf16.mxu0 0
        %1902 = vmatpush1.bf16.msra.mxu0 %v1869
        %1903 = vmatprep.subr.bf16.mxu0 0
        %1904 = vmatpush1.bf16.msra.mxu0 %v1870
        %1905 = vmatprep.subr.bf16.mxu0 0
        %1906 = vmatpush1.bf16.msra.mxu0 %v1871
        %1907 = vmatprep.subr.bf16.mxu0 0
        %1908 = vmatpush1.bf16.msra.mxu0 %v1872
        %1909 = vmatprep.subr.bf16.mxu0 0
        %1910 = vmatpush1.bf16.msra.mxu0 %v1873
        %1911 = vmatprep.subr.bf16.mxu0 0
        %1912 = vmatpush1.bf16.msra.mxu0 %v1874
        %1913 = vmatprep.subr.bf16.mxu0 0
        %1914 = vmatpush1.bf16.msra.mxu0 %v1875
        %1915 = vmatprep.subr.bf16.mxu0 0
        %1916 = vmatpush1.bf16.msra.mxu0 %v1876
        %1917 = vmatprep.subr.bf16.mxu0 0
        %1918 = vmatpush1.bf16.msra.mxu0 %v1877
        %1919 = vmatprep.subr.bf16.mxu0 0
        %1920 = vmatpush1.bf16.msra.mxu0 %v1878
        %1921 = vmatprep.subr.bf16.mxu0 0
        %1922 = vmatpush1.bf16.msra.mxu0 %v1879
        %1923 = vmatprep.subr.bf16.mxu0 0
        %1924 = vmatpush1.bf16.msra.mxu0 %v1880
        %1925 = vmatprep.subr.bf16.mxu0 0
        %1926 = vmatpush1.bf16.msra.mxu0 %v1881
        %1927 = vmatprep.subr.bf16.mxu0 0
        %1928 = vmatpush1.bf16.msra.mxu0 %v1882
        %1929 = vmatprep.subr.bf16.mxu0 0
        %1930 = vmatpush1.bf16.msra.mxu0 %v1883
        %1931 = vmatprep.subr.bf16.mxu0 0
        %1932 = vmatpush1.bf16.msra.mxu0 %v1884
        %1933 = vmatprep.mubr.bf16.mxu0 %v421
        %1934 = vmatmul.mubr.bf16.gmra.mrb[0].mxu0 %v420
        %v1935 = vpop.f32.mrb[0].mxu0
        %v1936 = vadd.f32 0.0, %v1935
        %v1937 = vpop.f32.mrb[0].mxu0
        %v1938 = vpop.f32.mrb[0].mxu0
        %v1939 = vadd.f32 0.0, %v1938
        %v1940 = vpop.f32.mrb[0].mxu0
        %1941 = vdwg.mxu0
        %v1942 = vstv %s347
        %v1943 = vmul.f32 %v1942, %v1936
        %v1944 = vmul.f32 %v1942, %v1939
        %v1945 = vadd.f32 %v1767, %v1943
        %v1946 = vadd.f32 %v1768, %v1944
        %v1947 = vld [vmem:[%s292 + $0x7] sm:$0x1]
        %v1948 = vmul.f32 %v1942, %v1947
        %v1949 = vadd.f32 %v1771, %v1948
        %v1951 = vlaneseq
        %v1952 = vshrl.u32 %v1951, 7
        %v1953 = vsub.s32 0, %v1952
        %v1954 = vrot.slane %v1949, %v1953
        %v1956 = vadd.f32 %v1945, %v1954
        %v1957 = vadd.f32 %v1946, %v1954
        %1958 = vst [vmem:[%s336] sm:$0xff] %v1956
        %1959 = vst [vmem:[%s336 + $0x8] sm:$0xff] %v1957
        %s1960 = sand.u32 %s155, 1
        %s1961 = scalar_lea.sflag [#allocation4], %s1960
        %s1962 = sand.u32 %s155, 1
        %s1963 = smul.addr %s1962, 16
        %s1964 = scalar_lea.vmem [#allocation12], %s1963
        // Predicated region
        $region61: #{tpu_custom_call.1} parent=39 // pred_check
          %p1965 = pneg %p165
        $region62: #{tpu_custom_call.1} parent=39 // pred_check_branch
          %1967 = sbr.rel (%p1965) target = $region64
        $region63: #{tpu_custom_call.1} parent=39 // pred_region
          %s1969 = ssub.s32 256, 256
          %1970 = vsyncadd %s1961, %s1969
          %s1971 = smul.addr %s27, 128
          %s1972 = scalar_lea.hbm %s5, %s1971
          %s1973 = sshll.u32 %s1964, 4
          %s1974 = int_to_ptr.vmem [resolvable:$true] %s1973
          %1979 = dma.vmem_to_hbm [thread:$0]  %s1974, 256, %s1972, %s1961, 128, 512, 8
        $region64: #{tpu_custom_call.1} parent=39 // pred_fallthru
          _
      $region40: #{tpu_custom_call.1} parent=5 // pred_fallthru
        _
      %p1980 = scmp.le.s32.totalorder 2, %s22
      // Predicated region
      $region65: #{tpu_custom_call.1} parent=5 // pred_check
        %p1981 = pneg %p1980
      $region66: #{tpu_custom_call.1} parent=5 // pred_check_branch
        %1983 = sbr.rel (%p1981) target = $region68
      $region67: #{tpu_custom_call.1} parent=5 // pred_region
        %s1984 = ssub.s32 %s22, 2
        // Predicated region
        $region69: #{tpu_custom_call.1} parent=67 // pred_check
          %p1985 = pneg %p171
        $region70: #{tpu_custom_call.1} parent=67 // pred_check_branch
          %1987 = sbr.rel (%p1985) target = $region72
        $region71: #{tpu_custom_call.1} parent=67 // pred_region
          %s1988 = sand.u32 %s156, 1
          %s1989 = scalar_lea.sflag [#allocation4], %s1988
          %s1990 = sand.u32 %s156, 1
          %s1991 = smul.addr %s1990, 16
          %s1992 = scalar_lea.vmem [#allocation12], %s1991
          %1993 = dma.done %s1989, 256
        $region72: #{tpu_custom_call.1} parent=67 // pred_fallthru
          _
      $region68: #{tpu_custom_call.1} parent=5 // pred_fallthru
        _
    $region6: #{tpu_custom_call.1} parent=1 // loop_footer
      %s26 = sadd.s32 1, %s22
    $region7: #{tpu_custom_call.1} parent=1 // loop_footer_branch
      %21 = sbr.rel target = $region3
    $region8: #{tpu_custom_call.1} parent=1 // loop_exit
      _
    %1994 = vsyncpa [#allocation3], 1
    %s1995 = scalar_lea.sflag [#allocation3], 1
    %1996 = vsyncpa %s1995, 1
    %1997 = vsyncpa [#allocation8], 1
    %s1998 = scalar_lea.sflag [#allocation8], 1
    %1999 = vsyncpa %s1998, 1
    %2000 = vsyncpa [#allocation11], 1
    %s2001 = scalar_lea.sflag [#allocation11], 1
    %2002 = vsyncpa %s2001, 1
    %2003 = vsyncpa [#allocation4], 1
    %s2004 = scalar_lea.sflag [#allocation4], 1
    %2005 = vsyncpa %s2004, 1
    %2006 = vsyncpa [#allocation5], 1
    %s2007 = scalar_lea.sflag [#allocation5], 1
    %2008 = vsyncpa %s2007, 1

</llo_original>
